<compile_context>
chip_gen: v5e
topology: v5e:2x2
jax: 0.10.0
libtpu: 0.0.40
codegen_flags: <defaults>
</compile_context>

<pallas_src>
import functools

import jax
import jax.numpy as jnp
from jax.experimental import pallas as pl
from jax.experimental.pallas import tpu as pltpu

_C1 = 0.01 ** 2
_C2 = 0.03 ** 2

# Gaussian window rows from the PyTorch GaussianAverage module
# (rows 0 and 2 are identical, row 1 differs -> two horizontal taps).
_GAUSS_ROW_A = (0.0947, 0.1183)   # (side, mid) for window rows 0 and 2
_GAUSS_ROW_B = (0.1183, 0.1478)   # (side, mid) for window row 1

# Conservative count of simultaneously-live full-plane f32 intermediates in
# the kernel body (inputs, 5 pooled sums, pooling temporaries, masks).
_LIVE_F32_PLANES = 14


# --------------------------------------------------------------------------
# Hardware / tiling helpers
# --------------------------------------------------------------------------
def _tpu_vmem_and_cores():
    """(per-core VMEM bytes, TensorCores per chip) - conservative fallback."""
    vmem_cap = 64 * 1024 * 1024
    num_cores = 2
    try:
        info = pltpu.get_tpu_info()
        vmem_cap = int(info.vmem_capacity_bytes)
        # v7x: 64 MiB per TC and 2 TCs/chip; v5e/v6e: 128 MiB and 1 TC.
        num_cores = 2 if vmem_cap <= 96 * 1024 * 1024 else 1
    except Exception:
        pass
    return vmem_cap, num_cores


def _plane_footprint_bytes(H, W, in_dtype, out_dtype):
    """VMEM bytes needed per (H, W) plane incl. pipeline buffers, with
    (8, 128) layout rounding."""
    Hr = max(8, ((H + 7) // 8) * 8)
    Wr = max(128, ((W + 127) // 128) * 128)
    elems = Hr * Wr
    in_b = jnp.dtype(in_dtype).itemsize
    out_b = jnp.dtype(out_dtype).itemsize
    # live f32 intermediates + 2 inputs x 2 pipeline buffers + output x 2.
    return elems * (_LIVE_F32_PLANES * 4 + 4 * in_b + 2 * out_b)


def _pick_block_planes(nc, per_plane, budget, num_cores):
    """Largest divisor of nc that fits the budget while keeping enough grid
    steps for pipelining and (on v7x) both TensorCores."""
    max_b = max(1, budget // max(per_plane, 1))
    divs = [d for d in range(1, nc + 1) if nc % d == 0 and d <= max_b] or [1]
    min_steps = 2 * num_cores
    good = [d for d in divs if nc // d >= min_steps] or divs
    # Prefer step counts that split evenly across cores, then the largest B.
    return max(good, key=lambda d: (((nc // d) % num_cores) == 0, d))


@functools.lru_cache(maxsize=None)
def _roll_supported(H, W):
    """Probe whether pltpu.roll lowers for rank-3 (B, H, W) blocks at this
    shape; fall back to slice+concat neighbour shifts otherwise."""
    def probe(x_ref, o_ref):
        a = x_ref[...]
        o_ref[...] = (pltpu.roll(a, 1, 1) + pltpu.roll(a, H - 1, 1)
                      + pltpu.roll(a, 1, 2) + pltpu.roll(a, W - 1, 2))

    try:
        x = jnp.zeros((2, H, W), jnp.float32)
        out = pl.pallas_call(
            probe, out_shape=jax.ShapeDtypeStruct(x.shape, x.dtype))(x)
        jax.block_until_ready(out)
        return True
    except Exception:
        return False


# --------------------------------------------------------------------------
# Kernel
# --------------------------------------------------------------------------
def _ssim_kernel(x_ref, y_ref, o_ref, *, w_a, w_b, scale, pad_mode,
                 comp_mode, eval_mode, use_roll):
    """Processes a (B, H, W) block of image planes.

    pad_mode: "reflect" | "zero" | "none".  For "none" (pad=False) the border
    rows/cols of the output are garbage and are discarded by the wrapper.
    """
    B, H, W = x_ref.shape
    f32 = jnp.float32

    # Single upcast per input; everything downstream is f32.
    xf = x_ref[...].astype(f32)
    yf = y_ref[...].astype(f32)

    fix_edges = pad_mode != "none"
    if fix_edges:
        col = jax.lax.broadcasted_iota(jnp.int32, (B, H, W), 2)
        row = jax.lax.broadcasted_iota(jnp.int32, (B, H, W), 1)
        is_c0, is_cl = col == 0, col == W - 1
        is_r0, is_rl = row == 0, row == H - 1

    def neighbor_sum(a, axis):
        """a[i-1] + a[i+1] along `axis`; border entries are wrapped/duplicated
        and patched by fix_border (or discarded for pad=False)."""
        n = a.shape[axis]
        if use_roll:
            # XLU rotations; direction-agnostic since the two rolls are summed.
            return pltpu.roll(a, 1, axis) + pltpu.roll(a, n - 1, axis)
        prev = jnp.concatenate(
            [jax.lax.slice_in_dim(a, 0, 1, axis=axis),
             jax.lax.slice_in_dim(a, 0, n - 1, axis=axis)], axis=axis)
        nxt = jnp.concatenate(
            [jax.lax.slice_in_dim(a, 1, n, axis=axis),
             jax.lax.slice_in_dim(a, n - 1, n, axis=axis)], axis=axis)
        return prev + nxt

    def fix_border(s, a, axis, lo_mask, hi_mask):
        """Patch the two border slices of a neighbour-sum so it matches
        reflection / zero padding by one pixel."""
        n = a.shape[axis]
        lo = jax.lax.slice_in_dim(a, 1, 2, axis=axis)          # a[..1..]
        hi = jax.lax.slice_in_dim(a, n - 2, n - 1, axis=axis)  # a[..n-2..]
        if pad_mode == "reflect":
            lo = lo + lo
            hi = hi + hi
        s = jnp.where(lo_mask, lo, s)
        s = jnp.where(hi_mask, hi, s)
        return s

    def pool(a):
        """3x3 window applied to plane `a` (weights w_a/w_b, or box sums)."""
        hsum = neighbor_sum(a, 2)                 # columns j-1 and j+1
        if fix_edges:
            hsum = fix_border(hsum, a, 2, is_c0, is_cl)
        if w_a is None:                           # box window (unscaled sums)
            h_a = hsum + a
            h_b = h_a
        else:                                     # gaussian window rows A / B
            h_a = f32(w_a[0]) * hsum + f32(w_a[1]) * a
            h_b = f32(w_b[0]) * hsum + f32(w_b[1]) * a
        vsum = neighbor_sum(h_a, 1)               # rows i-1 and i+1 (row A)
        if fix_edges:
            vsum = fix_border(vsum, h_a, 1, is_r0, is_rl)
        return vsum + h_b                         # + centre row (row B)

    # Products computed once; pools of the 5 planes.
    s_x = pool(xf)
    s_y = pool(yf)
    s_xx = pool(xf * xf)
    s_yy = pool(yf * yf)
    s_xy = pool(xf * yf)

    # Window scale folded into the constants.  With s = scale:
    #   mu = s*S,  E = s*Sq  =>  SSIM_n and SSIM_d each carry an s^3 factor
    # that cancels in the ratio, so we evaluate the rescaled forms below.
    c1 = f32(_C1 / (scale * scale))
    c2 = f32(_C2 / scale)
    p_xy = s_x * s_y
    q = s_x * s_x + s_y * s_y
    if scale != 1.0:
        sp = f32(scale) * p_xy
        sq = f32(scale) * q
    else:
        sp, sq = p_xy, q
    ssim_n = (p_xy + p_xy + c1) * ((s_xy - sp) * 2.0 + c2)
    ssim_d = (q + c1) * ((s_xx + s_yy) - sq + c2)
    # Exact divide keeps the 2e-5 tolerance (approx reciprocal may not).
    ratio = ssim_n / ssim_d

    if eval_mode:
        out = ratio
    elif comp_mode:
        out = jnp.clip(1.0 - ratio, 0.0, 1.0) * 0.5
    else:
        out = jnp.clip((1.0 - ratio) * 0.5, 0.0, 1.0)

    o_ref[...] = out.astype(o_ref.dtype)


# --------------------------------------------------------------------------
# Wrapper (matches the PyTorch SSIM module's forward)
# --------------------------------------------------------------------------
def ssim(x, y, *, pad=True, pad_reflection=True, gaussian_average=False,
         comp_mode=False, eval_mode=False):
    """Pallas SSIM.  x, y: (N, C, H, W).  Returns (N, C, H, W) when pad=True,
    otherwise (N, C, H-2, W-2)."""
    N, C, H, W = x.shape
    NC = N * C

    xf = x.reshape(NC, H, W)
    yf = y.reshape(NC, H, W)

    vmem_cap, num_cores = _tpu_vmem_and_cores()
    per_plane = _plane_footprint_bytes(H, W, x.dtype, x.dtype)
    budget = int(vmem_cap * 0.55)
    B = _pick_block_planes(NC, per_plane, budget, num_cores)
    vmem_limit = int(min(vmem_cap * 7 // 8,
                         max(B * per_plane * 5 // 4, 32 * 1024 * 1024)))

    if gaussian_average:
        w_a, w_b, scale = _GAUSS_ROW_A, _GAUSS_ROW_B, 1.0
    else:
        w_a = w_b = None
        scale = 1.0 / 9.0

    pad_mode = ("reflect" if pad_reflection else "zero") if pad else "none"

    kernel = functools.partial(
        _ssim_kernel, w_a=w_a, w_b=w_b, scale=scale, pad_mode=pad_mode,
        comp_mode=comp_mode, eval_mode=eval_mode,
        use_roll=_roll_supported(H, W))

    out_full = pl.pallas_call(
        kernel,
        out_shape=jax.ShapeDtypeStruct((NC, H, W), x.dtype),
        grid_spec=pltpu.PrefetchScalarGridSpec(
            num_scalar_prefetch=0,
            grid=(NC // B,),
            in_specs=[pl.BlockSpec((B, H, W), lambda i: (i, 0, 0)),
                      pl.BlockSpec((B, H, W), lambda i: (i, 0, 0))],
            out_specs=pl.BlockSpec((B, H, W), lambda i: (i, 0, 0))),
        compiler_params=pltpu.CompilerParams(
            dimension_semantics=("parallel",),
            vmem_limit_bytes=vmem_limit),
    )(xf, yf)

    out_full = out_full.reshape(N, C, H, W)
    if pad:
        return out_full
    # pad=False: kernel stored the full lane-dense (H, W) plane; take the
    # valid interior here (cheap wrapper slice, keeps in-kernel stores dense).
    return out_full[:, :, 1:H - 1, 1:W - 1]


# --------------------------------------------------------------------------
# Pure-JAX reference and self-test
# --------------------------------------------------------------------------
def _ssim_reference(x, y, *, window=None, pad=True, pad_reflection=True,
                    comp_mode=False, eval_mode=False):
    if pad:
        mode = "reflect" if pad_reflection else "constant"
        xp = jnp.pad(x, ((0, 0), (0, 0), (1, 1), (1, 1)), mode=mode)
        yp = jnp.pad(y, ((0, 0), (0, 0), (1, 1), (1, 1)), mode=mode)
    else:
        xp, yp = x, y
    Ho, Wo = xp.shape[2] - 2, xp.shape[3] - 2
    if window is None:
        window = [[1.0 / 9.0] * 3] * 3

    def pool(a):
        acc = jnp.zeros(a.shape[:2] + (Ho, Wo), jnp.float32)
        for di in range(3):
            for dj in range(3):
                acc = acc + jnp.float32(window[di][dj]) * a[:, :, di:di + Ho, dj:dj + Wo]
        return acc

    mu_x, mu_y = pool(xp), pool(yp)
    sig_x = pool(xp * xp) - mu_x * mu_x
    sig_y = pool(yp * yp) - mu_y * mu_y
    sig_xy = pool(xp * yp) - mu_x * mu_y
    n = (2 * mu_x * mu_y + _C1) * (2 * sig_xy + _C2)
    d = (mu_x * mu_x + mu_y * mu_y + _C1) * (sig_x + sig_y + _C2)
    r = n / d
    if eval_mode:
        return r
    if comp_mode:
        return jnp.clip(1.0 - r, 0.0, 1.0) * 0.5
    return jnp.clip((1.0 - r) * 0.5, 0.0, 1.0)


if __name__ == "__main__":
    key = jax.random.PRNGKey(0)
    kx, ky = jax.random.split(key)
    N, C, H, W = 2, 4, 16, 16
    x = jax.random.uniform(kx, (N, C, H, W), dtype=jnp.float32)
    y = jax.random.uniform(ky, (N, C, H, W), dtype=jnp.float32)

    gauss_window = [[0.0947, 0.1183, 0.0947],
                    [0.1183, 0.1478, 0.1183],
                    [0.0947, 0.1183, 0.0947]]

    configs = [
        dict(pad=True, pad_reflection=True, gaussian_average=False),   # default
        dict(pad=True, pad_reflection=True, gaussian_average=True),    # gaussian
        dict(pad=True, pad_reflection=False, gaussian_average=False),  # zero pad
        dict(pad=False, pad_reflection=True, gaussian_average=False),  # no pad
    ]
    for cfg in configs:
        out = ssim(x, y, **cfg)
        jax.block_until_ready(out)
        ref = _ssim_reference(
            x, y,
            window=gauss_window if cfg["gaussian_average"] else None,
            pad=cfg["pad"], pad_reflection=cfg["pad_reflection"])
        assert out.shape == ref.shape, (cfg, out.shape, ref.shape)
        assert jnp.allclose(out, ref, atol=2e-5, rtol=2e-5), cfg

    print("KERNEL_OK")
</pallas_src>

<mosaic_0001>
module attributes {stable_mosaic.version = 11 : i64} {
  func.func @probe(%arg0: memref<2x16x16xf32, #tpu.memory_space<vmem>>, %arg1: memref<2x16x16xf32, #tpu.memory_space<vmem>>) attributes {dimension_semantics = [], scalar_prefetch = 0 : i64, scratch_operands = 0 : i64, tpu.core_type = #tpu.core_type<tc>} {
    %c0 = arith.constant 0 : index
    %c0_0 = arith.constant 0 : index
    %c0_1 = arith.constant 0 : index
    %0 = vector.load %arg0[%c0, %c0_0, %c0_1] : memref<2x16x16xf32, #tpu.memory_space<vmem>>, vector<2x16x16xf32>
    %c1_i32 = arith.constant 1 : i32
    %1 = tpu.dynamic_rotate %0 by %c1_i32 dim 1 : vector<2x16x16xf32>, i32 -> vector<2x16x16xf32>
    %c15_i32 = arith.constant 15 : i32
    %2 = tpu.dynamic_rotate %0 by %c15_i32 dim 1 : vector<2x16x16xf32>, i32 -> vector<2x16x16xf32>
    %3 = arith.addf %1, %2 : vector<2x16x16xf32>
    %c1_i32_2 = arith.constant 1 : i32
    %4 = tpu.dynamic_rotate %0 by %c1_i32_2 dim 2 : vector<2x16x16xf32>, i32 -> vector<2x16x16xf32>
    %5 = arith.addf %3, %4 : vector<2x16x16xf32>
    %c15_i32_3 = arith.constant 15 : i32
    %6 = tpu.dynamic_rotate %0 by %c15_i32_3 dim 2 : vector<2x16x16xf32>, i32 -> vector<2x16x16xf32>
    %7 = arith.addf %5, %6 : vector<2x16x16xf32>
    %c0_4 = arith.constant 0 : index
    %c0_5 = arith.constant 0 : index
    %c0_6 = arith.constant 0 : index
    %8 = vector.load %arg1[%c0_4, %c0_5, %c0_6] : memref<2x16x16xf32, #tpu.memory_space<vmem>>, vector<2x16x16xf32>
    tpu.vector_store %arg1[%c0_4, %c0_5, %c0_6], %7 {strides = array<i32>} : memref<2x16x16xf32, #tpu.memory_space<vmem>>, vector<2x16x16xf32>,
    return
  }
}

module attributes {stable_mosaic.version = 11 : i64} {
  func.func @_ssim_kernel(%arg0: i32, %arg1: memref<2x16x16xf32, #tpu.memory_space<vmem>>, %arg2: memref<2x16x16xf32, #tpu.memory_space<vmem>>, %arg3: memref<2x16x16xf32, #tpu.memory_space<vmem>>) attributes {dimension_semantics = [#tpu.dimension_semantics<parallel>], iteration_bounds = array<i64: 4>, scalar_prefetch = 0 : i64, scratch_operands = 0 : i64, tpu.core_type = #tpu.core_type<tc>, window_params = [{transform_indices = @transform_0, window_bounds = array<i64: 2, 16, 16>}, {transform_indices = @transform_1, window_bounds = array<i64: 2, 16, 16>}, {transform_indices = @transform_2, window_bounds = array<i64: 2, 16, 16>}]} {
    %c0 = arith.constant 0 : index
    %c0_0 = arith.constant 0 : index
    %c0_1 = arith.constant 0 : index
    %0 = vector.load %arg1[%c0, %c0_0, %c0_1] : memref<2x16x16xf32, #tpu.memory_space<vmem>>, vector<2x16x16xf32>
    %c0_2 = arith.constant 0 : index
    %c0_3 = arith.constant 0 : index
    %c0_4 = arith.constant 0 : index
    %1 = vector.load %arg2[%c0_2, %c0_3, %c0_4] : memref<2x16x16xf32, #tpu.memory_space<vmem>>, vector<2x16x16xf32>
    %2 = tpu.iota {dimensions = array<i32: 2>} : vector<2x16x16xi32>
    %3 = tpu.iota {dimensions = array<i32: 1>} : vector<2x16x16xi32>
    %c0_i32 = arith.constant 0 : i32
    %4 = vector.broadcast %c0_i32 : i32 to vector<2x16x16xi32>
    %5 = arith.cmpi eq, %2, %4 : vector<2x16x16xi32>
    %c15_i32 = arith.constant 15 : i32
    %6 = vector.broadcast %c15_i32 : i32 to vector<2x16x16xi32>
    %7 = arith.cmpi eq, %2, %6 : vector<2x16x16xi32>
    %c0_i32_5 = arith.constant 0 : i32
    %8 = vector.broadcast %c0_i32_5 : i32 to vector<2x16x16xi32>
    %9 = arith.cmpi eq, %3, %8 : vector<2x16x16xi32>
    %c15_i32_6 = arith.constant 15 : i32
    %10 = vector.broadcast %c15_i32_6 : i32 to vector<2x16x16xi32>
    %11 = arith.cmpi eq, %3, %10 : vector<2x16x16xi32>
    %12 = vector.extract_strided_slice %0 {offsets = [0, 0, 0], sizes = [2, 16, 1], strides = [1, 1, 1]} : vector<2x16x16xf32> to vector<2x16x1xf32>
    %13 = vector.extract_strided_slice %0 {offsets = [0, 0, 0], sizes = [2, 16, 15], strides = [1, 1, 1]} : vector<2x16x16xf32> to vector<2x16x15xf32>
    %14 = tpu.concatenate %12, %13 in 2 : vector<2x16x1xf32>, vector<2x16x15xf32> -> vector<2x16x16xf32>
    %15 = vector.extract_strided_slice %0 {offsets = [0, 0, 1], sizes = [2, 16, 15], strides = [1, 1, 1]} : vector<2x16x16xf32> to vector<2x16x15xf32>
    %16 = vector.extract_strided_slice %0 {offsets = [0, 0, 15], sizes = [2, 16, 1], strides = [1, 1, 1]} : vector<2x16x16xf32> to vector<2x16x1xf32>
    %17 = tpu.concatenate %15, %16 in 2 : vector<2x16x15xf32>, vector<2x16x1xf32> -> vector<2x16x16xf32>
    %18 = arith.addf %14, %17 : vector<2x16x16xf32>
    %19 = vector.extract_strided_slice %0 {offsets = [0, 0, 1], sizes = [2, 16, 1], strides = [1, 1, 1]} : vector<2x16x16xf32> to vector<2x16x1xf32>
    %20 = vector.extract_strided_slice %0 {offsets = [0, 0, 14], sizes = [2, 16, 1], strides = [1, 1, 1]} : vector<2x16x16xf32> to vector<2x16x1xf32>
    %21 = arith.addf %19, %19 : vector<2x16x1xf32>
    %22 = arith.addf %20, %20 : vector<2x16x1xf32>
    %23 = vector.shape_cast %21 : vector<2x16x1xf32> to vector<2x16x1xf32>
    %24 = vector.broadcast %23 : vector<2x16x1xf32> to vector<2x16x16xf32>
    %25 = arith.select %5, %24, %18 : vector<2x16x16xi1>, vector<2x16x16xf32>
    %26 = vector.shape_cast %22 : vector<2x16x1xf32> to vector<2x16x1xf32>
    %27 = vector.broadcast %26 : vector<2x16x1xf32> to vector<2x16x16xf32>
    %28 = arith.select %7, %27, %25 : vector<2x16x16xi1>, vector<2x16x16xf32>
    %29 = arith.addf %28, %0 : vector<2x16x16xf32>
    %30 = vector.extract_strided_slice %29 {offsets = [0, 0, 0], sizes = [2, 1, 16], strides = [1, 1, 1]} : vector<2x16x16xf32> to vector<2x1x16xf32>
    %31 = vector.extract_strided_slice %29 {offsets = [0, 0, 0], sizes = [2, 15, 16], strides = [1, 1, 1]} : vector<2x16x16xf32> to vector<2x15x16xf32>
    %32 = tpu.concatenate %30, %31 in 1 : vector<2x1x16xf32>, vector<2x15x16xf32> -> vector<2x16x16xf32>
    %33 = vector.extract_strided_slice %29 {offsets = [0, 1, 0], sizes = [2, 15, 16], strides = [1, 1, 1]} : vector<2x16x16xf32> to vector<2x15x16xf32>
    %34 = vector.extract_strided_slice %29 {offsets = [0, 15, 0], sizes = [2, 1, 16], strides = [1, 1, 1]} : vector<2x16x16xf32> to vector<2x1x16xf32>
    %35 = tpu.concatenate %33, %34 in 1 : vector<2x15x16xf32>, vector<2x1x16xf32> -> vector<2x16x16xf32>
    %36 = arith.addf %32, %35 : vector<2x16x16xf32>
    %37 = vector.extract_strided_slice %29 {offsets = [0, 1, 0], sizes = [2, 1, 16], strides = [1, 1, 1]} : vector<2x16x16xf32> to vector<2x1x16xf32>
    %38 = vector.extract_strided_slice %29 {offsets = [0, 14, 0], sizes = [2, 1, 16], strides = [1, 1, 1]} : vector<2x16x16xf32> to vector<2x1x16xf32>
    %39 = arith.addf %37, %37 : vector<2x1x16xf32>
    %40 = arith.addf %38, %38 : vector<2x1x16xf32>
    %41 = vector.shape_cast %39 : vector<2x1x16xf32> to vector<2x1x16xf32>
    %42 = vector.broadcast %41 : vector<2x1x16xf32> to vector<2x16x16xf32>
    %43 = arith.select %9, %42, %36 : vector<2x16x16xi1>, vector<2x16x16xf32>
    %44 = vector.shape_cast %40 : vector<2x1x16xf32> to vector<2x1x16xf32>
    %45 = vector.broadcast %44 : vector<2x1x16xf32> to vector<2x16x16xf32>
    %46 = arith.select %11, %45, %43 : vector<2x16x16xi1>, vector<2x16x16xf32>
    %47 = arith.addf %46, %29 : vector<2x16x16xf32>
    %48 = vector.extract_strided_slice %1 {offsets = [0, 0, 0], sizes = [2, 16, 1], strides = [1, 1, 1]} : vector<2x16x16xf32> to vector<2x16x1xf32>
    %49 = vector.extract_strided_slice %1 {offsets = [0, 0, 0], sizes = [2, 16, 15], strides = [1, 1, 1]} : vector<2x16x16xf32> to vector<2x16x15xf32>
    %50 = tpu.concatenate %48, %49 in 2 : vector<2x16x1xf32>, vector<2x16x15xf32> -> vector<2x16x16xf32>
    %51 = vector.extract_strided_slice %1 {offsets = [0, 0, 1], sizes = [2, 16, 15], strides = [1, 1, 1]} : vector<2x16x16xf32> to vector<2x16x15xf32>
    %52 = vector.extract_strided_slice %1 {offsets = [0, 0, 15], sizes = [2, 16, 1], strides = [1, 1, 1]} : vector<2x16x16xf32> to vector<2x16x1xf32>
    %53 = tpu.concatenate %51, %52 in 2 : vector<2x16x15xf32>, vector<2x16x1xf32> -> vector<2x16x16xf32>
    %54 = arith.addf %50, %53 : vector<2x16x16xf32>
    %55 = vector.extract_strided_slice %1 {offsets = [0, 0, 1], sizes = [2, 16, 1], strides = [1, 1, 1]} : vector<2x16x16xf32> to vector<2x16x1xf32>
    %56 = vector.extract_strided_slice %1 {offsets = [0, 0, 14], sizes = [2, 16, 1], strides = [1, 1, 1]} : vector<2x16x16xf32> to vector<2x16x1xf32>
    %57 = arith.addf %55, %55 : vector<2x16x1xf32>
    %58 = arith.addf %56, %56 : vector<2x16x1xf32>
    %59 = vector.shape_cast %57 : vector<2x16x1xf32> to vector<2x16x1xf32>
    %60 = vector.broadcast %59 : vector<2x16x1xf32> to vector<2x16x16xf32>
    %61 = arith.select %5, %60, %54 : vector<2x16x16xi1>, vector<2x16x16xf32>
    %62 = vector.shape_cast %58 : vector<2x16x1xf32> to vector<2x16x1xf32>
    %63 = vector.broadcast %62 : vector<2x16x1xf32> to vector<2x16x16xf32>
    %64 = arith.select %7, %63, %61 : vector<2x16x16xi1>, vector<2x16x16xf32>
    %65 = arith.addf %64, %1 : vector<2x16x16xf32>
    %66 = vector.extract_strided_slice %65 {offsets = [0, 0, 0], sizes = [2, 1, 16], strides = [1, 1, 1]} : vector<2x16x16xf32> to vector<2x1x16xf32>
    %67 = vector.extract_strided_slice %65 {offsets = [0, 0, 0], sizes = [2, 15, 16], strides = [1, 1, 1]} : vector<2x16x16xf32> to vector<2x15x16xf32>
    %68 = tpu.concatenate %66, %67 in 1 : vector<2x1x16xf32>, vector<2x15x16xf32> -> vector<2x16x16xf32>
    %69 = vector.extract_strided_slice %65 {offsets = [0, 1, 0], sizes = [2, 15, 16], strides = [1, 1, 1]} : vector<2x16x16xf32> to vector<2x15x16xf32>
    %70 = vector.extract_strided_slice %65 {offsets = [0, 15, 0], sizes = [2, 1, 16], strides = [1, 1, 1]} : vector<2x16x16xf32> to vector<2x1x16xf32>
    %71 = tpu.concatenate %69, %70 in 1 : vector<2x15x16xf32>, vector<2x1x16xf32> -> vector<2x16x16xf32>
    %72 = arith.addf %68, %71 : vector<2x16x16xf32>
    %73 = vector.extract_strided_slice %65 {offsets = [0, 1, 0], sizes = [2, 1, 16], strides = [1, 1, 1]} : vector<2x16x16xf32> to vector<2x1x16xf32>
    %74 = vector.extract_strided_slice %65 {offsets = [0, 14, 0], sizes = [2, 1, 16], strides = [1, 1, 1]} : vector<2x16x16xf32> to vector<2x1x16xf32>
    %75 = arith.addf %73, %73 : vector<2x1x16xf32>
    %76 = arith.addf %74, %74 : vector<2x1x16xf32>
    %77 = vector.shape_cast %75 : vector<2x1x16xf32> to vector<2x1x16xf32>
    %78 = vector.broadcast %77 : vector<2x1x16xf32> to vector<2x16x16xf32>
    %79 = arith.select %9, %78, %72 : vector<2x16x16xi1>, vector<2x16x16xf32>
    %80 = vector.shape_cast %76 : vector<2x1x16xf32> to vector<2x1x16xf32>
    %81 = vector.broadcast %80 : vector<2x1x16xf32> to vector<2x16x16xf32>
    %82 = arith.select %11, %81, %79 : vector<2x16x16xi1>, vector<2x16x16xf32>
    %83 = arith.addf %82, %65 : vector<2x16x16xf32>
    %84 = arith.mulf %0, %0 : vector<2x16x16xf32>
    %85 = vector.extract_strided_slice %84 {offsets = [0, 0, 0], sizes = [2, 16, 1], strides = [1, 1, 1]} : vector<2x16x16xf32> to vector<2x16x1xf32>
    %86 = vector.extract_strided_slice %84 {offsets = [0, 0, 0], sizes = [2, 16, 15], strides = [1, 1, 1]} : vector<2x16x16xf32> to vector<2x16x15xf32>
    %87 = tpu.concatenate %85, %86 in 2 : vector<2x16x1xf32>, vector<2x16x15xf32> -> vector<2x16x16xf32>
    %88 = vector.extract_strided_slice %84 {offsets = [0, 0, 1], sizes = [2, 16, 15], strides = [1, 1, 1]} : vector<2x16x16xf32> to vector<2x16x15xf32>
    %89 = vector.extract_strided_slice %84 {offsets = [0, 0, 15], sizes = [2, 16, 1], strides = [1, 1, 1]} : vector<2x16x16xf32> to vector<2x16x1xf32>
    %90 = tpu.concatenate %88, %89 in 2 : vector<2x16x15xf32>, vector<2x16x1xf32> -> vector<2x16x16xf32>
    %91 = arith.addf %87, %90 : vector<2x16x16xf32>
    %92 = vector.extract_strided_slice %84 {offsets = [0, 0, 1], sizes = [2, 16, 1], strides = [1, 1, 1]} : vector<2x16x16xf32> to vector<2x16x1xf32>
    %93 = vector.extract_strided_slice %84 {offsets = [0, 0, 14], sizes = [2, 16, 1], strides = [1, 1, 1]} : vector<2x16x16xf32> to vector<2x16x1xf32>
    %94 = arith.addf %92, %92 : vector<2x16x1xf32>
    %95 = arith.addf %93, %93 : vector<2x16x1xf32>
    %96 = vector.shape_cast %94 : vector<2x16x1xf32> to vector<2x16x1xf32>
    %97 = vector.broadcast %96 : vector<2x16x1xf32> to vector<2x16x16xf32>
    %98 = arith.select %5, %97, %91 : vector<2x16x16xi1>, vector<2x16x16xf32>
    %99 = vector.shape_cast %95 : vector<2x16x1xf32> to vector<2x16x1xf32>
    %100 = vector.broadcast %99 : vector<2x16x1xf32> to vector<2x16x16xf32>
    %101 = arith.select %7, %100, %98 : vector<2x16x16xi1>, vector<2x16x16xf32>
    %102 = arith.addf %101, %84 : vector<2x16x16xf32>
    %103 = vector.extract_strided_slice %102 {offsets = [0, 0, 0], sizes = [2, 1, 16], strides = [1, 1, 1]} : vector<2x16x16xf32> to vector<2x1x16xf32>
    %104 = vector.extract_strided_slice %102 {offsets = [0, 0, 0], sizes = [2, 15, 16], strides = [1, 1, 1]} : vector<2x16x16xf32> to vector<2x15x16xf32>
    %105 = tpu.concatenate %103, %104 in 1 : vector<2x1x16xf32>, vector<2x15x16xf32> -> vector<2x16x16xf32>
    %106 = vector.extract_strided_slice %102 {offsets = [0, 1, 0], sizes = [2, 15, 16], strides = [1, 1, 1]} : vector<2x16x16xf32> to vector<2x15x16xf32>
    %107 = vector.extract_strided_slice %102 {offsets = [0, 15, 0], sizes = [2, 1, 16], strides = [1, 1, 1]} : vector<2x16x16xf32> to vector<2x1x16xf32>
    %108 = tpu.concatenate %106, %107 in 1 : vector<2x15x16xf32>, vector<2x1x16xf32> -> vector<2x16x16xf32>
    %109 = arith.addf %105, %108 : vector<2x16x16xf32>
    %110 = vector.extract_strided_slice %102 {offsets = [0, 1, 0], sizes = [2, 1, 16], strides = [1, 1, 1]} : vector<2x16x16xf32> to vector<2x1x16xf32>
    %111 = vector.extract_strided_slice %102 {offsets = [0, 14, 0], sizes = [2, 1, 16], strides = [1, 1, 1]} : vector<2x16x16xf32> to vector<2x1x16xf32>
    %112 = arith.addf %110, %110 : vector<2x1x16xf32>
    %113 = arith.addf %111, %111 : vector<2x1x16xf32>
    %114 = vector.shape_cast %112 : vector<2x1x16xf32> to vector<2x1x16xf32>
    %115 = vector.broadcast %114 : vector<2x1x16xf32> to vector<2x16x16xf32>
    %116 = arith.select %9, %115, %109 : vector<2x16x16xi1>, vector<2x16x16xf32>
    %117 = vector.shape_cast %113 : vector<2x1x16xf32> to vector<2x1x16xf32>
    %118 = vector.broadcast %117 : vector<2x1x16xf32> to vector<2x16x16xf32>
    %119 = arith.select %11, %118, %116 : vector<2x16x16xi1>, vector<2x16x16xf32>
    %120 = arith.addf %119, %102 : vector<2x16x16xf32>
    %121 = arith.mulf %1, %1 : vector<2x16x16xf32>
    %122 = vector.extract_strided_slice %121 {offsets = [0, 0, 0], sizes = [2, 16, 1], strides = [1, 1, 1]} : vector<2x16x16xf32> to vector<2x16x1xf32>
    %123 = vector.extract_strided_slice %121 {offsets = [0, 0, 0], sizes = [2, 16, 15], strides = [1, 1, 1]} : vector<2x16x16xf32> to vector<2x16x15xf32>
    %124 = tpu.concatenate %122, %123 in 2 : vector<2x16x1xf32>, vector<2x16x15xf32> -> vector<2x16x16xf32>
    %125 = vector.extract_strided_slice %121 {offsets = [0, 0, 1], sizes = [2, 16, 15], strides = [1, 1, 1]} : vector<2x16x16xf32> to vector<2x16x15xf32>
    %126 = vector.extract_strided_slice %121 {offsets = [0, 0, 15], sizes = [2, 16, 1], strides = [1, 1, 1]} : vector<2x16x16xf32> to vector<2x16x1xf32>
    %127 = tpu.concatenate %125, %126 in 2 : vector<2x16x15xf32>, vector<2x16x1xf32> -> vector<2x16x16xf32>
    %128 = arith.addf %124, %127 : vector<2x16x16xf32>
    %129 = vector.extract_strided_slice %121 {offsets = [0, 0, 1], sizes = [2, 16, 1], strides = [1, 1, 1]} : vector<2x16x16xf32> to vector<2x16x1xf32>
    %130 = vector.extract_strided_slice %121 {offsets = [0, 0, 14], sizes = [2, 16, 1], strides = [1, 1, 1]} : vector<2x16x16xf32> to vector<2x16x1xf32>
    %131 = arith.addf %129, %129 : vector<2x16x1xf32>
    %132 = arith.addf %130, %130 : vector<2x16x1xf32>
    %133 = vector.shape_cast %131 : vector<2x16x1xf32> to vector<2x16x1xf32>
    %134 = vector.broadcast %133 : vector<2x16x1xf32> to vector<2x16x16xf32>
    %135 = arith.select %5, %134, %128 : vector<2x16x16xi1>, vector<2x16x16xf32>
    %136 = vector.shape_cast %132 : vector<2x16x1xf32> to vector<2x16x1xf32>
    %137 = vector.broadcast %136 : vector<2x16x1xf32> to vector<2x16x16xf32>
    %138 = arith.select %7, %137, %135 : vector<2x16x16xi1>, vector<2x16x16xf32>
    %139 = arith.addf %138, %121 : vector<2x16x16xf32>
    %140 = vector.extract_strided_slice %139 {offsets = [0, 0, 0], sizes = [2, 1, 16], strides = [1, 1, 1]} : vector<2x16x16xf32> to vector<2x1x16xf32>
    %141 = vector.extract_strided_slice %139 {offsets = [0, 0, 0], sizes = [2, 15, 16], strides = [1, 1, 1]} : vector<2x16x16xf32> to vector<2x15x16xf32>
    %142 = tpu.concatenate %140, %141 in 1 : vector<2x1x16xf32>, vector<2x15x16xf32> -> vector<2x16x16xf32>
    %143 = vector.extract_strided_slice %139 {offsets = [0, 1, 0], sizes = [2, 15, 16], strides = [1, 1, 1]} : vector<2x16x16xf32> to vector<2x15x16xf32>
    %144 = vector.extract_strided_slice %139 {offsets = [0, 15, 0], sizes = [2, 1, 16], strides = [1, 1, 1]} : vector<2x16x16xf32> to vector<2x1x16xf32>
    %145 = tpu.concatenate %143, %144 in 1 : vector<2x15x16xf32>, vector<2x1x16xf32> -> vector<2x16x16xf32>
    %146 = arith.addf %142, %145 : vector<2x16x16xf32>
    %147 = vector.extract_strided_slice %139 {offsets = [0, 1, 0], sizes = [2, 1, 16], strides = [1, 1, 1]} : vector<2x16x16xf32> to vector<2x1x16xf32>
    %148 = vector.extract_strided_slice %139 {offsets = [0, 14, 0], sizes = [2, 1, 16], strides = [1, 1, 1]} : vector<2x16x16xf32> to vector<2x1x16xf32>
    %149 = arith.addf %147, %147 : vector<2x1x16xf32>
    %150 = arith.addf %148, %148 : vector<2x1x16xf32>
    %151 = vector.shape_cast %149 : vector<2x1x16xf32> to vector<2x1x16xf32>
    %152 = vector.broadcast %151 : vector<2x1x16xf32> to vector<2x16x16xf32>
    %153 = arith.select %9, %152, %146 : vector<2x16x16xi1>, vector<2x16x16xf32>
    %154 = vector.shape_cast %150 : vector<2x1x16xf32> to vector<2x1x16xf32>
    %155 = vector.broadcast %154 : vector<2x1x16xf32> to vector<2x16x16xf32>
    %156 = arith.select %11, %155, %153 : vector<2x16x16xi1>, vector<2x16x16xf32>
    %157 = arith.addf %156, %139 : vector<2x16x16xf32>
    %158 = arith.mulf %0, %1 : vector<2x16x16xf32>
    %159 = vector.extract_strided_slice %158 {offsets = [0, 0, 0], sizes = [2, 16, 1], strides = [1, 1, 1]} : vector<2x16x16xf32> to vector<2x16x1xf32>
    %160 = vector.extract_strided_slice %158 {offsets = [0, 0, 0], sizes = [2, 16, 15], strides = [1, 1, 1]} : vector<2x16x16xf32> to vector<2x16x15xf32>
    %161 = tpu.concatenate %159, %160 in 2 : vector<2x16x1xf32>, vector<2x16x15xf32> -> vector<2x16x16xf32>
    %162 = vector.extract_strided_slice %158 {offsets = [0, 0, 1], sizes = [2, 16, 15], strides = [1, 1, 1]} : vector<2x16x16xf32> to vector<2x16x15xf32>
    %163 = vector.extract_strided_slice %158 {offsets = [0, 0, 15], sizes = [2, 16, 1], strides = [1, 1, 1]} : vector<2x16x16xf32> to vector<2x16x1xf32>
    %164 = tpu.concatenate %162, %163 in 2 : vector<2x16x15xf32>, vector<2x16x1xf32> -> vector<2x16x16xf32>
    %165 = arith.addf %161, %164 : vector<2x16x16xf32>
    %166 = vector.extract_strided_slice %158 {offsets = [0, 0, 1], sizes = [2, 16, 1], strides = [1, 1, 1]} : vector<2x16x16xf32> to vector<2x16x1xf32>
    %167 = vector.extract_strided_slice %158 {offsets = [0, 0, 14], sizes = [2, 16, 1], strides = [1, 1, 1]} : vector<2x16x16xf32> to vector<2x16x1xf32>
    %168 = arith.addf %166, %166 : vector<2x16x1xf32>
    %169 = arith.addf %167, %167 : vector<2x16x1xf32>
    %170 = vector.shape_cast %168 : vector<2x16x1xf32> to vector<2x16x1xf32>
    %171 = vector.broadcast %170 : vector<2x16x1xf32> to vector<2x16x16xf32>
    %172 = arith.select %5, %171, %165 : vector<2x16x16xi1>, vector<2x16x16xf32>
    %173 = vector.shape_cast %169 : vector<2x16x1xf32> to vector<2x16x1xf32>
    %174 = vector.broadcast %173 : vector<2x16x1xf32> to vector<2x16x16xf32>
    %175 = arith.select %7, %174, %172 : vector<2x16x16xi1>, vector<2x16x16xf32>
    %176 = arith.addf %175, %158 : vector<2x16x16xf32>
    %177 = vector.extract_strided_slice %176 {offsets = [0, 0, 0], sizes = [2, 1, 16], strides = [1, 1, 1]} : vector<2x16x16xf32> to vector<2x1x16xf32>
    %178 = vector.extract_strided_slice %176 {offsets = [0, 0, 0], sizes = [2, 15, 16], strides = [1, 1, 1]} : vector<2x16x16xf32> to vector<2x15x16xf32>
    %179 = tpu.concatenate %177, %178 in 1 : vector<2x1x16xf32>, vector<2x15x16xf32> -> vector<2x16x16xf32>
    %180 = vector.extract_strided_slice %176 {offsets = [0, 1, 0], sizes = [2, 15, 16], strides = [1, 1, 1]} : vector<2x16x16xf32> to vector<2x15x16xf32>
    %181 = vector.extract_strided_slice %176 {offsets = [0, 15, 0], sizes = [2, 1, 16], strides = [1, 1, 1]} : vector<2x16x16xf32> to vector<2x1x16xf32>
    %182 = tpu.concatenate %180, %181 in 1 : vector<2x15x16xf32>, vector<2x1x16xf32> -> vector<2x16x16xf32>
    %183 = arith.addf %179, %182 : vector<2x16x16xf32>
    %184 = vector.extract_strided_slice %176 {offsets = [0, 1, 0], sizes = [2, 1, 16], strides = [1, 1, 1]} : vector<2x16x16xf32> to vector<2x1x16xf32>
    %185 = vector.extract_strided_slice %176 {offsets = [0, 14, 0], sizes = [2, 1, 16], strides = [1, 1, 1]} : vector<2x16x16xf32> to vector<2x1x16xf32>
    %186 = arith.addf %184, %184 : vector<2x1x16xf32>
    %187 = arith.addf %185, %185 : vector<2x1x16xf32>
    %188 = vector.shape_cast %186 : vector<2x1x16xf32> to vector<2x1x16xf32>
    %189 = vector.broadcast %188 : vector<2x1x16xf32> to vector<2x16x16xf32>
    %190 = arith.select %9, %189, %183 : vector<2x16x16xi1>, vector<2x16x16xf32>
    %191 = vector.shape_cast %187 : vector<2x1x16xf32> to vector<2x1x16xf32>
    %192 = vector.broadcast %191 : vector<2x1x16xf32> to vector<2x16x16xf32>
    %193 = arith.select %11, %192, %190 : vector<2x16x16xi1>, vector<2x16x16xf32>
    %194 = arith.addf %193, %176 : vector<2x16x16xf32>
    %195 = arith.mulf %47, %83 : vector<2x16x16xf32>
    %196 = arith.mulf %47, %47 : vector<2x16x16xf32>
    %197 = arith.mulf %83, %83 : vector<2x16x16xf32>
    %198 = arith.addf %196, %197 : vector<2x16x16xf32>
    %cst = arith.constant 0.111111112 : f32
    %199 = vector.broadcast %cst : f32 to vector<2x16x16xf32>
    %200 = arith.mulf %199, %195 : vector<2x16x16xf32>
    %cst_7 = arith.constant 0.111111112 : f32
    %201 = vector.broadcast %cst_7 : f32 to vector<2x16x16xf32>
    %202 = arith.mulf %201, %198 : vector<2x16x16xf32>
    %203 = arith.addf %195, %195 : vector<2x16x16xf32>
    %cst_8 = arith.constant 8.100000e-03 : f32
    %204 = vector.broadcast %cst_8 : f32 to vector<2x16x16xf32>
    %205 = arith.addf %203, %204 : vector<2x16x16xf32>
    %206 = arith.subf %194, %200 : vector<2x16x16xf32>
    %cst_9 = arith.constant 2.000000e+00 : f32
    %207 = vector.broadcast %cst_9 : f32 to vector<2x16x16xf32>
    %208 = arith.mulf %206, %207 : vector<2x16x16xf32>
    %cst_10 = arith.constant 8.100000e-03 : f32
    %209 = vector.broadcast %cst_10 : f32 to vector<2x16x16xf32>
    %210 = arith.addf %208, %209 : vector<2x16x16xf32>
    %211 = arith.mulf %205, %210 : vector<2x16x16xf32>
    %cst_11 = arith.constant 8.100000e-03 : f32
    %212 = vector.broadcast %cst_11 : f32 to vector<2x16x16xf32>
    %213 = arith.addf %198, %212 : vector<2x16x16xf32>
    %214 = arith.addf %120, %157 : vector<2x16x16xf32>
    %215 = arith.subf %214, %202 : vector<2x16x16xf32>
    %cst_12 = arith.constant 8.100000e-03 : f32
    %216 = vector.broadcast %cst_12 : f32 to vector<2x16x16xf32>
    %217 = arith.addf %215, %216 : vector<2x16x16xf32>
    %218 = arith.mulf %213, %217 : vector<2x16x16xf32>
    %219 = arith.divf %211, %218 : vector<2x16x16xf32>
    %cst_13 = arith.constant 1.000000e+00 : f32
    %220 = vector.broadcast %cst_13 : f32 to vector<2x16x16xf32>
    %221 = arith.subf %220, %219 : vector<2x16x16xf32>
    %cst_14 = arith.constant 5.000000e-01 : f32
    %222 = vector.broadcast %cst_14 : f32 to vector<2x16x16xf32>
    %223 = arith.mulf %221, %222 : vector<2x16x16xf32>
    %cst_15 = arith.constant 0.000000e+00 : f32
    %cst_16 = arith.constant 1.000000e+00 : f32
    %224 = vector.broadcast %cst_15 : f32 to vector<2x16x16xf32>
    %225 = arith.maximumf %224, %223 : vector<2x16x16xf32>
    %226 = vector.broadcast %cst_16 : f32 to vector<2x16x16xf32>
    %227 = arith.minimumf %226, %225 : vector<2x16x16xf32>
    %c0_17 = arith.constant 0 : index
    %c0_18 = arith.constant 0 : index
    %c0_19 = arith.constant 0 : index
    %228 = vector.load %arg3[%c0_17, %c0_18, %c0_19] : memref<2x16x16xf32, #tpu.memory_space<vmem>>, vector<2x16x16xf32>
    tpu.vector_store %arg3[%c0_17, %c0_18, %c0_19], %227 {strides = array<i32>} : memref<2x16x16xf32, #tpu.memory_space<vmem>>, vector<2x16x16xf32>,
    return
  }
  func.func @transform_0(%arg0: i32) -> (i32, i32, i32) {
    %c0_i32 = arith.constant 0 : i32
    %c0_i32_0 = arith.constant 0 : i32
    %c0_i32_1 = arith.constant 0 : i32
    return %arg0, %c0_i32, %c0_i32_0 : i32, i32, i32
  }
  func.func @transform_1(%arg0: i32) -> (i32, i32, i32) {
    %c0_i32 = arith.constant 0 : i32
    %c0_i32_0 = arith.constant 0 : i32
    %c0_i32_1 = arith.constant 0 : i32
    return %arg0, %c0_i32, %c0_i32_0 : i32, i32, i32
  }
  func.func @transform_2(%arg0: i32) -> (i32, i32, i32) {
    %c0_i32 = arith.constant 0 : i32
    %c0_i32_0 = arith.constant 0 : i32
    %c0_i32_1 = arith.constant 0 : i32
    return %arg0, %c0_i32, %c0_i32_0 : i32, i32, i32
  }
}

</mosaic_0001>

<llo_original>
// kernel: tpu_custom_call.1
$region0: #{tpu_custom_call.1}
  #allocation0 [shape = 'u32[]', space=smem, size = 0x4, offset = 0x4, fixed_abs, tag = 'smem constant byte address 0x4 - core index']
  #allocation1 [shape = 'u32[72,128]{1,0:T(1,128)}', space=vmem, size = 0x9000, scoped, tag = 'internal scratch']
  %s0 = inlined_call_operand.hbm [shape: f32[2,16,16], index: 0, kind: input, shape index: {}]
  %s1 = inlined_call_operand.hbm [shape: f32[2,16,16], index: 1, kind: output, shape index: {}]
  %s2 = sld [smem:[#allocation0]]
  $region18: #{tpu_custom_call.1} parent=0
    _
  %s4 = ssub.s32 1, %s2
  %s5 = scalar_select 0, %s4, %s2
  $region1: #{tpu_custom_call.1} parent=0
    #allocation2 [shape = 'u8[16384]{0}', space=vmem, size = 0x4000, scoped, tag = 'input window, operand 0, single buffered']
    #allocation3 [shape = 's32[1]{0}', space=sflag, size = 0x4, scoped, tag = 'scoped memory for tpu_custom_call.1']
    #allocation4 [shape = 's32[1]{0}', space=sflag, size = 0x4, scoped, tag = 'scoped memory for tpu_custom_call.1']
    #allocation5 [shape = 'u8[16384]{0}', space=vmem, size = 0x4000, scoped, tag = 'output window, operand 0, single buffered']
    %6 = vsyncpa [#allocation3], 0
    %7 = vsyncpa [#allocation4], 0
    // Predicated region
    $region2: #{tpu_custom_call.1} parent=1 // pred_check
      _
    $region3: #{tpu_custom_call.1} parent=1 // pred_check_branch
      %9 = sbr.rel (0) target = $region5
    $region4: #{tpu_custom_call.1} parent=1 // pred_region
      %11 = vsyncadd [#allocation3], 0
      %s12 = sshll.u32 %s0, 4
      %s13 = int_to_ptr.hbm [resolvable:$true] %s12
      %s14 = sshll.u32 [#allocation2], 4
      %s15 = int_to_ptr.vmem [resolvable:$true] %s14
      %20 = dma.hbm_to_vmem [thread:$0]  %s13, 512, %s15, [#allocation3], 128, 128, 8
    $region5: #{tpu_custom_call.1} parent=1 // pred_fallthru
      _
    // Predicated region
    $region6: #{tpu_custom_call.1} parent=1 // pred_check
      _
    $region7: #{tpu_custom_call.1} parent=1 // pred_check_branch
      %22 = sbr.rel (0) target = $region9
    $region8: #{tpu_custom_call.1} parent=1 // pred_region
      %24 = dma.done [#allocation3], 512
    $region9: #{tpu_custom_call.1} parent=1 // pred_fallthru
      _
    %v25 = vld [vmem:[#allocation2] sm:$0xff]
    %v26 = vld [vmem:[#allocation2 + $0x8] sm:$0xff]
    %v27 = vld [vmem:[#allocation2 + $0x10] sm:$0xff]
    %v28 = vld [vmem:[#allocation2 + $0x18] sm:$0xff]
    %v29 = vrot.slane %v25, 7
    %v30 = vrot.slane %v27, 7
    %v31 = vrot.slane %v26, 7
    %v32 = vrot.slane %v28, 7
    %v33 = vlaneseq
    %v34 = vshrl.u32 %v33, 7
    %vm35 = vcmp.lt.s32.totalorder %v34, 1
    %v36 = vsel %vm35, %v29, %v31
    %v37 = vsel %vm35, %v30, %v32
    %v38 = vsel %vm35, %v31, %v29
    %v39 = vsel %vm35, %v32, %v30
    %v40 = vrot.slane %v25, 1
    %v41 = vrot.slane %v27, 1
    %v42 = vrot.slane %v26, 1
    %v43 = vrot.slane %v28, 1
    %vm44 = vcmp.lt.s32.totalorder %v34, 7
    %v45 = vsel %vm44, %v40, %v42
    %v46 = vsel %vm44, %v41, %v43
    %v47 = vsel %vm44, %v42, %v40
    %v48 = vsel %vm44, %v43, %v41
    %v49 = vadd.f32 %v38, %v45
    %v50 = vadd.f32 %v36, %v47
    %v51 = vadd.f32 %v39, %v46
    %v52 = vadd.f32 %v37, %v48
    %vm53 = vcmask 1047680
    %54 = vrot.lane.b32.xlu0 %v25, 16
    %v55 = vpop.permute.xlu0 %54
    %v56 = vsel %vm53, %v55, %v25
    %57 = vrot.lane.b32.xlu0 %v26, 16
    %v58 = vpop.permute.xlu0 %57
    %v59 = vsel %vm53, %v58, %v26
    %60 = vrot.lane.b32.xlu0 %v27, 16
    %v61 = vpop.permute.xlu0 %60
    %v62 = vsel %vm53, %v61, %v27
    %63 = vrot.lane.b32.xlu0 %v28, 16
    %v64 = vpop.permute.xlu0 %63
    %v65 = vsel %vm53, %v64, %v28
    %66 = vrot.lane.b32.xlu0 %v56, 16
    %v67 = vpop.permute.xlu0 %66
    %68 = vrot.lane.b32.xlu0 %v59, 16
    %v69 = vpop.permute.xlu0 %68
    %70 = vrot.lane.b32.xlu0 %v62, 16
    %v71 = vpop.permute.xlu0 %70
    %72 = vrot.lane.b32.xlu0 %v65, 16
    %v73 = vpop.permute.xlu0 %72
    %v74 = vsel %vm53, %v67, %v25
    %v75 = vsel %vm53, %v69, %v26
    %v76 = vsel %vm53, %v71, %v27
    %v77 = vsel %vm53, %v73, %v28
    %82 = vrot.lane.b32.xlu0 %v74, 113
    %v83 = vpop.permute.xlu0 %82
    %84 = vrot.lane.b32.xlu0 %v75, 113
    %v85 = vpop.permute.xlu0 %84
    %86 = vrot.lane.b32.xlu0 %v76, 113
    %v87 = vpop.permute.xlu0 %86
    %88 = vrot.lane.b32.xlu0 %v77, 113
    %v89 = vpop.permute.xlu0 %88
    %v94 = vadd.f32 %v49, %v83
    %v95 = vadd.f32 %v50, %v85
    %v96 = vadd.f32 %v51, %v87
    %v97 = vadd.f32 %v52, %v89
    %98 = vrot.lane.b32.xlu0 %v74, 127
    %v99 = vpop.permute.xlu0 %98
    %100 = vrot.lane.b32.xlu0 %v75, 127
    %v101 = vpop.permute.xlu0 %100
    %102 = vrot.lane.b32.xlu0 %v76, 127
    %v103 = vpop.permute.xlu0 %102
    %104 = vrot.lane.b32.xlu0 %v77, 127
    %v105 = vpop.permute.xlu0 %104
    %v110 = vadd.f32 %v94, %v99
    %v111 = vadd.f32 %v95, %v101
    %v112 = vadd.f32 %v96, %v103
    %v113 = vadd.f32 %v97, %v105
    %vm114 = vcmask 130048
    %115 = vst.msk [vmem:[#allocation5] sm:$0xff] %vm114, %v110
    %116 = vst.msk [vmem:[#allocation5 + $0x8] sm:$0xff] %vm114, %v111
    %117 = vst.msk [vmem:[#allocation5 + $0x10] sm:$0xff] %vm114, %v112
    %118 = vst.msk [vmem:[#allocation5 + $0x18] sm:$0xff] %vm114, %v113
    // Predicated region
    $region10: #{tpu_custom_call.1} parent=1 // pred_check
      _
    $region11: #{tpu_custom_call.1} parent=1 // pred_check_branch
      %120 = sbr.rel (0) target = $region13
    $region12: #{tpu_custom_call.1} parent=1 // pred_region
      %122 = vsyncadd [#allocation4], 0
      %s123 = sshll.u32 [#allocation5], 4
      %s124 = int_to_ptr.vmem [resolvable:$true] %s123
      %s125 = sshll.u32 %s1, 4
      %s126 = int_to_ptr.hbm [resolvable:$true] %s125
      %131 = dma.vmem_to_hbm [thread:$0]  %s124, 512, %s126, [#allocation4], 128, 128, 8
    $region13: #{tpu_custom_call.1} parent=1 // pred_fallthru
      _
    // Predicated region
    $region14: #{tpu_custom_call.1} parent=1 // pred_check
      _
    $region15: #{tpu_custom_call.1} parent=1 // pred_check_branch
      %133 = sbr.rel (0) target = $region17
    $region16: #{tpu_custom_call.1} parent=1 // pred_region
      %135 = dma.done [#allocation4], 512
    $region17: #{tpu_custom_call.1} parent=1 // pred_fallthru
      _
    %136 = vsyncpa [#allocation3], 1
    %137 = vsyncpa [#allocation4], 1

// kernel: tpu_custom_call.1
$region0: #{tpu_custom_call.1}
  #allocation0 [shape = 'u32[]', space=smem, size = 0x4, offset = 0x4, fixed_abs, tag = 'smem constant byte address 0x4 - core index']
  #allocation1 [shape = 'u32[72,128]{1,0:T(1,128)}', space=vmem, size = 0x9000, scoped, tag = 'internal scratch']
  %s0 = inlined_call_operand.hbm [shape: f32[8,16,16], index: 0, kind: input, shape index: {}]
  %s1 = inlined_call_operand.hbm [shape: f32[8,16,16], index: 1, kind: input, shape index: {}]
  %s2 = inlined_call_operand.hbm [shape: f32[8,16,16], index: 2, kind: output, shape index: {}]
  %s3 = sld [smem:[#allocation0]]
  $region49: #{tpu_custom_call.1} parent=0
    _
  %s5 = ssub.s32 1, %s3
  %s6 = scalar_select 0, %s5, %s3
  $region1: #{tpu_custom_call.1} parent=0
    #allocation2 [shape = 'u8[32768]{0}', space=vmem, size = 0x8000, scoped, tag = 'input window, operand 0']
    #allocation3 [shape = 's32[2]{0}', space=sflag, size = 0x8, scoped, tag = 'scoped memory for tpu_custom_call.1']
    #allocation4 [shape = 's32[2]{0}', space=sflag, size = 0x8, scoped, tag = 'scoped memory for tpu_custom_call.1']
    #allocation5 [shape = 'u8[32768]{0}', space=vmem, size = 0x8000, scoped, tag = 'input window, operand 1']
    #allocation6 [shape = 's32[2]{0}', space=sflag, size = 0x8, scoped, tag = 'scoped memory for tpu_custom_call.1']
    #allocation7 [shape = 'u8[32768]{0}', space=vmem, size = 0x8000, scoped, tag = 'output window, operand 0']
    %7 = vsyncpa [#allocation3], 0
    %s8 = scalar_lea.sflag [#allocation3], 1
    %9 = vsyncpa %s8, 0
    %10 = vsyncpa [#allocation6], 0
    %s11 = scalar_lea.sflag [#allocation6], 1
    %12 = vsyncpa %s11, 0
    %13 = vsyncpa [#allocation4], 0
    %s14 = scalar_lea.sflag [#allocation4], 1
    %15 = vsyncpa %s14, 0
    loop: start=0, step=1, limit=6
    $region2: #{tpu_custom_call.1} parent=1 // loop_pre_header
      _
    $region3: #{tpu_custom_call.1} parent=1 // loop_header
      %s17 = sphi 0, %s21
      %p18 = scmp.ge.s32.totalorder %s17, 6
      %s27 = sphi 0, %s29
      %s30 = sphi 0, %s27
      %s31 = sphi 0, %s30
      %s47 = sphi 0, %s31
      %s53 = sphi 0, %s55
      %s56 = sphi 0, %s53
      %s57 = sphi 0, %s56
      %s73 = sphi 0, %s57
      %s79 = sphi 0, %s81
      %s82 = sphi 0, %s79
      %s83 = sphi 0, %s82
      %s99 = sphi 0, %s83
    $region4: #{tpu_custom_call.1} parent=1 // loop_header_branch
      %20 = sbr.rel (%p18) target = $region8
    $region5: #{tpu_custom_call.1} parent=1 // loop_body
      %s22 = ssub.s32 %s17, 1
      %s23 = ssub.s32 %s17, 2
      %s24 = sadd.s32 %s17, 1
      %s25 = ssub.s32 %s17, %s24
      %p26 = scmp.eq.s32.totalorder %s25, 0
      %s28 = sadd.s32 %s27, 1
      %s29 = scalar_select %p26, %s27, %s28
      %p32 = pneg %p26
      %p33 = scmp.eq.s32.totalorder %s17, 3
      %p34 = por %p32, %p33
      %p35 = scmp.ne.s32.totalorder %s27, %s30
      %p36 = scmp.eq.s32.totalorder %s17, 0
      %p37 = por %p35, %p36
      %p38 = scmp.ne.s32.totalorder %s27, %s30
      %p39 = scmp.eq.s32.totalorder %s22, 3
      %p40 = por %p38, %p39
      %p41 = scmp.ne.s32.totalorder %s30, %s31
      %p42 = scmp.eq.s32.totalorder %s22, 0
      %p43 = por %p41, %p42
      %p44 = scmp.ne.s32.totalorder %s30, %s31
      %p45 = scmp.eq.s32.totalorder %s23, 3
      %p46 = por %p44, %p45
      %p48 = scmp.ne.s32.totalorder %s31, %s47
      %p49 = scmp.eq.s32.totalorder %s23, 0
      %p50 = por %p48, %p49
      %s51 = ssub.s32 %s17, %s24
      %p52 = scmp.eq.s32.totalorder %s51, 0
      %s54 = sadd.s32 %s53, 1
      %s55 = scalar_select %p52, %s53, %s54
      %p58 = pneg %p52
      %p59 = scmp.eq.s32.totalorder %s17, 3
      %p60 = por %p58, %p59
      %p61 = scmp.ne.s32.totalorder %s53, %s56
      %p62 = scmp.eq.s32.totalorder %s17, 0
      %p63 = por %p61, %p62
      %p64 = scmp.ne.s32.totalorder %s53, %s56
      %p65 = scmp.eq.s32.totalorder %s22, 3
      %p66 = por %p64, %p65
      %p67 = scmp.ne.s32.totalorder %s56, %s57
      %p68 = scmp.eq.s32.totalorder %s22, 0
      %p69 = por %p67, %p68
      %p70 = scmp.ne.s32.totalorder %s56, %s57
      %p71 = scmp.eq.s32.totalorder %s23, 3
      %p72 = por %p70, %p71
      %p74 = scmp.ne.s32.totalorder %s57, %s73
      %p75 = scmp.eq.s32.totalorder %s23, 0
      %p76 = por %p74, %p75
      %s77 = ssub.s32 %s17, %s24
      %p78 = scmp.eq.s32.totalorder %s77, 0
      %s80 = sadd.s32 %s79, 1
      %s81 = scalar_select %p78, %s79, %s80
      %p84 = pneg %p78
      %p85 = scmp.eq.s32.totalorder %s17, 3
      %p86 = por %p84, %p85
      %p87 = scmp.ne.s32.totalorder %s79, %s82
      %p88 = scmp.eq.s32.totalorder %s17, 0
      %p89 = por %p87, %p88
      %p90 = scmp.ne.s32.totalorder %s79, %s82
      %p91 = scmp.eq.s32.totalorder %s22, 3
      %p92 = por %p90, %p91
      %p93 = scmp.ne.s32.totalorder %s82, %s83
      %p94 = scmp.eq.s32.totalorder %s22, 0
      %p95 = por %p93, %p94
      %p96 = scmp.ne.s32.totalorder %s82, %s83
      %p97 = scmp.eq.s32.totalorder %s23, 3
      %p98 = por %p96, %p97
      %p100 = scmp.ne.s32.totalorder %s83, %s99
      %p101 = scmp.eq.s32.totalorder %s23, 0
      %p102 = por %p100, %p101
      %p103 = scmp.le.s32.totalorder 1, %s17
      %p104 = scmp.lt.s32.totalorder %s17, 5
      %p105 = pnand %p103, %p104
      %p106 = pneg %p105
      // Predicated region
      $region9: #{tpu_custom_call.1} parent=5 // pred_check
        _
      $region10: #{tpu_custom_call.1} parent=5 // pred_check_branch
        %108 = sbr.rel (%p105) target = $region12
      $region11: #{tpu_custom_call.1} parent=5 // pred_region
        %s109 = ssub.s32 %s17, 1
      $region12: #{tpu_custom_call.1} parent=5 // pred_fallthru
        _
      %p110 = scmp.lt.s32.totalorder %s17, 4
      // Predicated region
      $region13: #{tpu_custom_call.1} parent=5 // pred_check
        %p111 = pneg %p110
      $region14: #{tpu_custom_call.1} parent=5 // pred_check_branch
        %113 = sbr.rel (%p111) target = $region16
      $region15: #{tpu_custom_call.1} parent=5 // pred_region
        // Predicated region
        $region17: #{tpu_custom_call.1} parent=15 // pred_check
          %p114 = pneg %p37
        $region18: #{tpu_custom_call.1} parent=15 // pred_check_branch
          %116 = sbr.rel (%p114) target = $region20
        $region19: #{tpu_custom_call.1} parent=15 // pred_region
          %s117 = sand.u32 %s27, 1
          %s118 = scalar_lea.sflag [#allocation3], %s117
          %s119 = sand.u32 %s27, 1
          %s120 = smul.addr %s119, 32
          %s121 = scalar_lea.vmem [#allocation2], %s120
          %s122 = smul.u32 2, %s17
          %124 = vsyncadd %s118, 0
          %s125 = smul.addr %s122, 2
          %s126 = smul.addr %s125, 8
          %s127 = scalar_lea.hbm %s0, %s126
          %s128 = sshll.u32 %s127, 4
          %s129 = int_to_ptr.hbm [resolvable:$true] %s128
          %s130 = sshll.u32 %s121, 4
          %s131 = int_to_ptr.vmem [resolvable:$true] %s130
          %136 = dma.hbm_to_vmem [thread:$0]  %s129, 512, %s131, %s118, 128, 128, 8
        $region20: #{tpu_custom_call.1} parent=15 // pred_fallthru
          _
        // Predicated region
        $region21: #{tpu_custom_call.1} parent=15 // pred_check
          %p137 = pneg %p63
        $region22: #{tpu_custom_call.1} parent=15 // pred_check_branch
          %139 = sbr.rel (%p137) target = $region24
        $region23: #{tpu_custom_call.1} parent=15 // pred_region
          %s140 = sand.u32 %s53, 1
          %s141 = scalar_lea.sflag [#allocation6], %s140
          %s142 = sand.u32 %s53, 1
          %s143 = smul.addr %s142, 32
          %s144 = scalar_lea.vmem [#allocation5], %s143
          %s145 = smul.u32 2, %s17
          %147 = vsyncadd %s141, 0
          %s148 = smul.addr %s145, 2
          %s149 = smul.addr %s148, 8
          %s150 = scalar_lea.hbm %s1, %s149
          %s151 = sshll.u32 %s150, 4
          %s152 = int_to_ptr.hbm [resolvable:$true] %s151
          %s153 = sshll.u32 %s144, 4
          %s154 = int_to_ptr.vmem [resolvable:$true] %s153
          %159 = dma.hbm_to_vmem [thread:$0]  %s152, 512, %s154, %s141, 128, 128, 8
        $region24: #{tpu_custom_call.1} parent=15 // pred_fallthru
          _
      $region16: #{tpu_custom_call.1} parent=5 // pred_fallthru
        _
      %p160 = scmp.le.s32.totalorder 1, %s17
      %p161 = scmp.lt.s32.totalorder %s17, 5
      %p162 = pnand %p160, %p161
      %p163 = pneg %p162
      // Predicated region
      $region25: #{tpu_custom_call.1} parent=5 // pred_check
        _
      $region26: #{tpu_custom_call.1} parent=5 // pred_check_branch
        %165 = sbr.rel (%p162) target = $region28
      $region27: #{tpu_custom_call.1} parent=5 // pred_region
        %s166 = ssub.s32 %s17, 1
        %s167 = sand.u32 %s30, 1
        %s168 = scalar_lea.sflag [#allocation3], %s167
        %s169 = sand.u32 %s30, 1
        %s170 = smul.addr %s169, 32
        %s171 = scalar_lea.vmem [#allocation2], %s170
        // Predicated region
        $region29: #{tpu_custom_call.1} parent=27 // pred_check
          %p172 = pneg %p43
        $region30: #{tpu_custom_call.1} parent=27 // pred_check_branch
          %174 = sbr.rel (%p172) target = $region32
        $region31: #{tpu_custom_call.1} parent=27 // pred_region
          %176 = dma.done %s168, 512
        $region32: #{tpu_custom_call.1} parent=27 // pred_fallthru
          _
        %s177 = sand.u32 %s56, 1
        %s178 = scalar_lea.sflag [#allocation6], %s177
        %s179 = sand.u32 %s56, 1
        %s180 = smul.addr %s179, 32
        %s181 = scalar_lea.vmem [#allocation5], %s180
        // Predicated region
        $region33: #{tpu_custom_call.1} parent=27 // pred_check
          %p182 = pneg %p69
        $region34: #{tpu_custom_call.1} parent=27 // pred_check_branch
          %184 = sbr.rel (%p182) target = $region36
        $region35: #{tpu_custom_call.1} parent=27 // pred_region
          %186 = dma.done %s178, 512
        $region36: #{tpu_custom_call.1} parent=27 // pred_fallthru
          _
        %s187 = sand.u32 %s30, 1
        %s188 = scalar_lea.sflag [#allocation3], %s187
        %s189 = sand.u32 %s30, 1
        %s190 = smul.addr %s189, 32
        %s191 = scalar_lea.vmem [#allocation2], %s190
        %p192 = pneg %p43
        %p193 = pneg %p40
        %s194 = sand.u32 %s56, 1
        %s195 = scalar_lea.sflag [#allocation6], %s194
        %s196 = sand.u32 %s56, 1
        %s197 = smul.addr %s196, 32
        %s198 = scalar_lea.vmem [#allocation5], %s197
        %p199 = pneg %p69
        %p200 = pneg %p66
        %p201 = pneg %p95
        %p202 = pneg %p92
        %s203 = sand.u32 %s82, 1
        %s204 = scalar_lea.sflag [#allocation4], %s203
        %s205 = sand.u32 %s82, 1
        %s206 = smul.addr %s205, 32
        %s207 = scalar_lea.vmem [#allocation7], %s206
        %s208 = smul.u32 2, %s22
        %s209 = smul.u32 2, %s22
        %s210 = smul.u32 2, %s22
        %v211 = vld [vmem:[%s171] sm:$0xff]
        %v212 = vld [vmem:[%s171 + $0x8] sm:$0xff]
        %v213 = vld [vmem:[%s171 + $0x10] sm:$0xff]
        %v214 = vld [vmem:[%s171 + $0x18] sm:$0xff]
        %v215 = vld [vmem:[%s181] sm:$0xff]
        %v216 = vld [vmem:[%s181 + $0x8] sm:$0xff]
        %v217 = vld [vmem:[%s181 + $0x10] sm:$0xff]
        %v218 = vld [vmem:[%s181 + $0x18] sm:$0xff]
        %v219 = vlaneseq
        %v220 = vand.u32 %v219, 127
        %v221 = vlaneseq
        %v222 = vshrl.u32 %v221, 7
        %v223 = vadd.s32 %v222, 8
        %vm224 = vcmp.eq.s32.totalorder %v220, 0
        %vm225 = vcmp.eq.s32.totalorder %v220, 15
        %vm226 = vcmp.eq.s32.totalorder %v222, 0
        %vm227 = vcmp.eq.s32.totalorder %v223, 0
        %vm228 = vcmp.eq.s32.totalorder %v222, 15
        %vm229 = vcmp.eq.s32.totalorder %v223, 15
        %234 = vrot.lane.b32.xlu0 %v211, 1
        %v235 = vpop.permute.xlu0 %234
        %236 = vrot.lane.b32.xlu0 %v212, 1
        %v237 = vpop.permute.xlu0 %236
        %238 = vrot.lane.b32.xlu0 %v213, 1
        %v239 = vpop.permute.xlu0 %238
        %240 = vrot.lane.b32.xlu0 %v214, 1
        %v241 = vpop.permute.xlu0 %240
        %vm246 = vcmask 7168
        %v247 = vsel %vm246, %v211, %v235
        %v248 = vsel %vm246, %v212, %v237
        %v249 = vsel %vm246, %v213, %v239
        %v250 = vsel %vm246, %v214, %v241
        %251 = vrot.lane.b32.xlu0 %v211, 127
        %v252 = vpop.permute.xlu0 %251
        %253 = vrot.lane.b32.xlu0 %v212, 127
        %v254 = vpop.permute.xlu0 %253
        %255 = vrot.lane.b32.xlu0 %v213, 127
        %v256 = vpop.permute.xlu0 %255
        %257 = vrot.lane.b32.xlu0 %v214, 127
        %v258 = vpop.permute.xlu0 %257
        %vm263 = vcmask 121856
        %v264 = vsel %vm263, %v252, %v211
        %v265 = vsel %vm263, %v254, %v212
        %v266 = vsel %vm263, %v256, %v213
        %v267 = vsel %vm263, %v258, %v214
        %v268 = vadd.f32 %v247, %v264
        %v269 = vadd.f32 %v248, %v265
        %v270 = vadd.f32 %v249, %v266
        %v271 = vadd.f32 %v250, %v267
        %v272 = vadd.f32 %v211, %v211
        %v273 = vadd.f32 %v212, %v212
        %v274 = vadd.f32 %v213, %v213
        %v275 = vadd.f32 %v214, %v214
        %277 = vset.pattern.permute.xlu0 1
        %278 = vperm.xlu0 %277, %v272
        %v279 = vpop.permute.xlu0 %278
        %282 = vset.pattern.permute.xlu0 1
        %283 = vperm.xlu0 %282, %v273
        %v284 = vpop.permute.xlu0 %283
        %287 = vset.pattern.permute.xlu0 1
        %288 = vperm.xlu0 %287, %v274
        %v289 = vpop.permute.xlu0 %288
        %292 = vset.pattern.permute.xlu0 1
        %293 = vperm.xlu0 %292, %v275
        %v294 = vpop.permute.xlu0 %293
        %v296 = vsel %vm224, %v279, %v268
        %v297 = vsel %vm224, %v284, %v269
        %v298 = vsel %vm224, %v289, %v270
        %v299 = vsel %vm224, %v294, %v271
        %300 = vset.pattern.permute.xlu0 14
        %301 = vperm.xlu0 %300, %v272
        %v302 = vpop.permute.xlu0 %301
        %304 = vset.pattern.permute.xlu0 14
        %305 = vperm.xlu0 %304, %v273
        %v306 = vpop.permute.xlu0 %305
        %308 = vset.pattern.permute.xlu0 14
        %309 = vperm.xlu0 %308, %v274
        %v310 = vpop.permute.xlu0 %309
        %312 = vset.pattern.permute.xlu0 14
        %313 = vperm.xlu0 %312, %v275
        %v314 = vpop.permute.xlu0 %313
        %v316 = vsel %vm225, %v302, %v296
        %v317 = vsel %vm225, %v306, %v297
        %v318 = vsel %vm225, %v310, %v298
        %v319 = vsel %vm225, %v314, %v299
        %v320 = vadd.f32 %v316, %v211
        %v321 = vadd.f32 %v317, %v212
        %v322 = vadd.f32 %v318, %v213
        %v323 = vadd.f32 %v319, %v214
        %vm328 = vcmask 1040384
        %v329 = vrot.slane %v320, 7
        %v330 = vrot.slane %v321, 7
        %v331 = vsel %vm328, %v329, %v330
        %v332 = vrot.slane %v322, 7
        %v333 = vrot.slane %v323, 7
        %v334 = vsel %vm328, %v332, %v333
        %v339 = vsel %vm328, %v320, %v329
        %v340 = vsel %vm328, %v322, %v332
        %vm341 = vcmask 1046528
        %v342 = vrot.slane %v320, 1
        %v343 = vrot.slane %v321, 1
        %v344 = vsel %vm341, %v342, %v343
        %v345 = vrot.slane %v322, 1
        %v346 = vrot.slane %v323, 1
        %v347 = vsel %vm341, %v345, %v346
        %v352 = vsel %vm341, %v343, %v321
        %v353 = vsel %vm341, %v346, %v323
        %v354 = vadd.f32 %v339, %v344
        %v355 = vadd.f32 %v331, %v352
        %v356 = vadd.f32 %v340, %v347
        %v357 = vadd.f32 %v334, %v353
        %v358 = vadd.f32 %v320, %v320
        %v359 = vadd.f32 %v322, %v322
        %v360 = vadd.f32 %v321, %v321
        %v361 = vadd.f32 %v323, %v323
        %v362 = vperm.slane %v358, 1
        %v363 = vperm.slane %v359, 1
        %v364 = vsel %vm226, %v362, %v354
        %v365 = vsel %vm227, %v362, %v355
        %v366 = vsel %vm226, %v363, %v356
        %v367 = vsel %vm227, %v363, %v357
        %v368 = vperm.slane %v360, 6
        %v369 = vperm.slane %v361, 6
        %v370 = vsel %vm228, %v368, %v364
        %v371 = vsel %vm229, %v368, %v365
        %v372 = vsel %vm228, %v369, %v366
        %v373 = vsel %vm229, %v369, %v367
        %v374 = vadd.f32 %v370, %v320
        %v375 = vadd.f32 %v371, %v321
        %v376 = vadd.f32 %v372, %v322
        %v377 = vadd.f32 %v373, %v323
        %382 = vrot.lane.b32.xlu0 %v215, 1
        %v383 = vpop.permute.xlu0 %382
        %384 = vrot.lane.b32.xlu0 %v216, 1
        %v385 = vpop.permute.xlu0 %384
        %386 = vrot.lane.b32.xlu0 %v217, 1
        %v387 = vpop.permute.xlu0 %386
        %388 = vrot.lane.b32.xlu0 %v218, 1
        %v389 = vpop.permute.xlu0 %388
        %v394 = vsel %vm246, %v215, %v383
        %v395 = vsel %vm246, %v216, %v385
        %v396 = vsel %vm246, %v217, %v387
        %v397 = vsel %vm246, %v218, %v389
        %398 = vrot.lane.b32.xlu0 %v215, 127
        %v399 = vpop.permute.xlu0 %398
        %400 = vrot.lane.b32.xlu0 %v216, 127
        %v401 = vpop.permute.xlu0 %400
        %402 = vrot.lane.b32.xlu0 %v217, 127
        %v403 = vpop.permute.xlu0 %402
        %404 = vrot.lane.b32.xlu0 %v218, 127
        %v405 = vpop.permute.xlu0 %404
        %v410 = vsel %vm263, %v399, %v215
        %v411 = vsel %vm263, %v401, %v216
        %v412 = vsel %vm263, %v403, %v217
        %v413 = vsel %vm263, %v405, %v218
        %v414 = vadd.f32 %v394, %v410
        %v415 = vadd.f32 %v395, %v411
        %v416 = vadd.f32 %v396, %v412
        %v417 = vadd.f32 %v397, %v413
        %v418 = vadd.f32 %v215, %v215
        %v419 = vadd.f32 %v216, %v216
        %v420 = vadd.f32 %v217, %v217
        %v421 = vadd.f32 %v218, %v218
        %423 = vset.pattern.permute.xlu0 1
        %424 = vperm.xlu0 %423, %v418
        %v425 = vpop.permute.xlu0 %424
        %428 = vset.pattern.permute.xlu0 1
        %429 = vperm.xlu0 %428, %v419
        %v430 = vpop.permute.xlu0 %429
        %433 = vset.pattern.permute.xlu0 1
        %434 = vperm.xlu0 %433, %v420
        %v435 = vpop.permute.xlu0 %434
        %438 = vset.pattern.permute.xlu0 1
        %439 = vperm.xlu0 %438, %v421
        %v440 = vpop.permute.xlu0 %439
        %v442 = vsel %vm224, %v425, %v414
        %v443 = vsel %vm224, %v430, %v415
        %v444 = vsel %vm224, %v435, %v416
        %v445 = vsel %vm224, %v440, %v417
        %446 = vset.pattern.permute.xlu0 14
        %447 = vperm.xlu0 %446, %v418
        %v448 = vpop.permute.xlu0 %447
        %450 = vset.pattern.permute.xlu0 14
        %451 = vperm.xlu0 %450, %v419
        %v452 = vpop.permute.xlu0 %451
        %454 = vset.pattern.permute.xlu0 14
        %455 = vperm.xlu0 %454, %v420
        %v456 = vpop.permute.xlu0 %455
        %458 = vset.pattern.permute.xlu0 14
        %459 = vperm.xlu0 %458, %v421
        %v460 = vpop.permute.xlu0 %459
        %v462 = vsel %vm225, %v448, %v442
        %v463 = vsel %vm225, %v452, %v443
        %v464 = vsel %vm225, %v456, %v444
        %v465 = vsel %vm225, %v460, %v445
        %v466 = vadd.f32 %v462, %v215
        %v467 = vadd.f32 %v463, %v216
        %v468 = vadd.f32 %v464, %v217
        %v469 = vadd.f32 %v465, %v218
        %v474 = vrot.slane %v466, 7
        %v475 = vrot.slane %v467, 7
        %v476 = vsel %vm328, %v474, %v475
        %v477 = vrot.slane %v468, 7
        %v478 = vrot.slane %v469, 7
        %v479 = vsel %vm328, %v477, %v478
        %v484 = vsel %vm328, %v466, %v474
        %v485 = vsel %vm328, %v468, %v477
        %v486 = vrot.slane %v466, 1
        %v487 = vrot.slane %v467, 1
        %v488 = vsel %vm341, %v486, %v487
        %v489 = vrot.slane %v468, 1
        %v490 = vrot.slane %v469, 1
        %v491 = vsel %vm341, %v489, %v490
        %v496 = vsel %vm341, %v487, %v467
        %v497 = vsel %vm341, %v490, %v469
        %v498 = vadd.f32 %v484, %v488
        %v499 = vadd.f32 %v476, %v496
        %v500 = vadd.f32 %v485, %v491
        %v501 = vadd.f32 %v479, %v497
        %v502 = vadd.f32 %v466, %v466
        %v503 = vadd.f32 %v468, %v468
        %v504 = vadd.f32 %v467, %v467
        %v505 = vadd.f32 %v469, %v469
        %v506 = vperm.slane %v502, 1
        %v507 = vperm.slane %v503, 1
        %v508 = vsel %vm226, %v506, %v498
        %v509 = vsel %vm227, %v506, %v499
        %v510 = vsel %vm226, %v507, %v500
        %v511 = vsel %vm227, %v507, %v501
        %v512 = vperm.slane %v504, 6
        %v513 = vperm.slane %v505, 6
        %v514 = vsel %vm228, %v512, %v508
        %v515 = vsel %vm229, %v512, %v509
        %v516 = vsel %vm228, %v513, %v510
        %v517 = vsel %vm229, %v513, %v511
        %v518 = vadd.f32 %v514, %v466
        %v519 = vadd.f32 %v515, %v467
        %v520 = vadd.f32 %v516, %v468
        %v521 = vadd.f32 %v517, %v469
        %v522 = vmul.f32 %v211, %v211
        %v523 = vmul.f32 %v212, %v212
        %v524 = vmul.f32 %v213, %v213
        %v525 = vmul.f32 %v214, %v214
        %530 = vrot.lane.b32.xlu0 %v522, 1
        %v531 = vpop.permute.xlu0 %530
        %532 = vrot.lane.b32.xlu0 %v523, 1
        %v533 = vpop.permute.xlu0 %532
        %534 = vrot.lane.b32.xlu0 %v524, 1
        %v535 = vpop.permute.xlu0 %534
        %536 = vrot.lane.b32.xlu0 %v525, 1
        %v537 = vpop.permute.xlu0 %536
        %v542 = vsel %vm246, %v522, %v531
        %v543 = vsel %vm246, %v523, %v533
        %v544 = vsel %vm246, %v524, %v535
        %v545 = vsel %vm246, %v525, %v537
        %546 = vrot.lane.b32.xlu0 %v522, 127
        %v547 = vpop.permute.xlu0 %546
        %548 = vrot.lane.b32.xlu0 %v523, 127
        %v549 = vpop.permute.xlu0 %548
        %550 = vrot.lane.b32.xlu0 %v524, 127
        %v551 = vpop.permute.xlu0 %550
        %552 = vrot.lane.b32.xlu0 %v525, 127
        %v553 = vpop.permute.xlu0 %552
        %v558 = vsel %vm263, %v547, %v522
        %v559 = vsel %vm263, %v549, %v523
        %v560 = vsel %vm263, %v551, %v524
        %v561 = vsel %vm263, %v553, %v525
        %v562 = vadd.f32 %v542, %v558
        %v563 = vadd.f32 %v543, %v559
        %v564 = vadd.f32 %v544, %v560
        %v565 = vadd.f32 %v545, %v561
        %v566 = vadd.f32 %v522, %v522
        %v567 = vadd.f32 %v523, %v523
        %v568 = vadd.f32 %v524, %v524
        %v569 = vadd.f32 %v525, %v525
        %571 = vset.pattern.permute.xlu0 1
        %572 = vperm.xlu0 %571, %v566
        %v573 = vpop.permute.xlu0 %572
        %576 = vset.pattern.permute.xlu0 1
        %577 = vperm.xlu0 %576, %v567
        %v578 = vpop.permute.xlu0 %577
        %581 = vset.pattern.permute.xlu0 1
        %582 = vperm.xlu0 %581, %v568
        %v583 = vpop.permute.xlu0 %582
        %586 = vset.pattern.permute.xlu0 1
        %587 = vperm.xlu0 %586, %v569
        %v588 = vpop.permute.xlu0 %587
        %v590 = vsel %vm224, %v573, %v562
        %v591 = vsel %vm224, %v578, %v563
        %v592 = vsel %vm224, %v583, %v564
        %v593 = vsel %vm224, %v588, %v565
        %594 = vset.pattern.permute.xlu0 14
        %595 = vperm.xlu0 %594, %v566
        %v596 = vpop.permute.xlu0 %595
        %598 = vset.pattern.permute.xlu0 14
        %599 = vperm.xlu0 %598, %v567
        %v600 = vpop.permute.xlu0 %599
        %602 = vset.pattern.permute.xlu0 14
        %603 = vperm.xlu0 %602, %v568
        %v604 = vpop.permute.xlu0 %603
        %606 = vset.pattern.permute.xlu0 14
        %607 = vperm.xlu0 %606, %v569
        %v608 = vpop.permute.xlu0 %607
        %v610 = vsel %vm225, %v596, %v590
        %v611 = vsel %vm225, %v600, %v591
        %v612 = vsel %vm225, %v604, %v592
        %v613 = vsel %vm225, %v608, %v593
        %v614 = vadd.f32 %v610, %v522
        %v615 = vadd.f32 %v611, %v523
        %v616 = vadd.f32 %v612, %v524
        %v617 = vadd.f32 %v613, %v525
        %v622 = vrot.slane %v614, 7
        %v623 = vrot.slane %v615, 7
        %v624 = vsel %vm328, %v622, %v623
        %v625 = vrot.slane %v616, 7
        %v626 = vrot.slane %v617, 7
        %v627 = vsel %vm328, %v625, %v626
        %v632 = vsel %vm328, %v614, %v622
        %v633 = vsel %vm328, %v616, %v625
        %v634 = vrot.slane %v614, 1
        %v635 = vrot.slane %v615, 1
        %v636 = vsel %vm341, %v634, %v635
        %v637 = vrot.slane %v616, 1
        %v638 = vrot.slane %v617, 1
        %v639 = vsel %vm341, %v637, %v638
        %v644 = vsel %vm341, %v635, %v615
        %v645 = vsel %vm341, %v638, %v617
        %v646 = vadd.f32 %v632, %v636
        %v647 = vadd.f32 %v624, %v644
        %v648 = vadd.f32 %v633, %v639
        %v649 = vadd.f32 %v627, %v645
        %v650 = vadd.f32 %v614, %v614
        %v651 = vadd.f32 %v616, %v616
        %v652 = vadd.f32 %v615, %v615
        %v653 = vadd.f32 %v617, %v617
        %v654 = vperm.slane %v650, 1
        %v655 = vperm.slane %v651, 1
        %v656 = vsel %vm226, %v654, %v646
        %v657 = vsel %vm227, %v654, %v647
        %v658 = vsel %vm226, %v655, %v648
        %v659 = vsel %vm227, %v655, %v649
        %v660 = vperm.slane %v652, 6
        %v661 = vperm.slane %v653, 6
        %v662 = vsel %vm228, %v660, %v656
        %v663 = vsel %vm229, %v660, %v657
        %v664 = vsel %vm228, %v661, %v658
        %v665 = vsel %vm229, %v661, %v659
        %v666 = vadd.f32 %v662, %v614
        %v667 = vadd.f32 %v663, %v615
        %v668 = vadd.f32 %v664, %v616
        %v669 = vadd.f32 %v665, %v617
        %v670 = vmul.f32 %v215, %v215
        %v671 = vmul.f32 %v216, %v216
        %v672 = vmul.f32 %v217, %v217
        %v673 = vmul.f32 %v218, %v218
        %678 = vrot.lane.b32.xlu0 %v670, 1
        %v679 = vpop.permute.xlu0 %678
        %680 = vrot.lane.b32.xlu0 %v671, 1
        %v681 = vpop.permute.xlu0 %680
        %682 = vrot.lane.b32.xlu0 %v672, 1
        %v683 = vpop.permute.xlu0 %682
        %684 = vrot.lane.b32.xlu0 %v673, 1
        %v685 = vpop.permute.xlu0 %684
        %v690 = vsel %vm246, %v670, %v679
        %v691 = vsel %vm246, %v671, %v681
        %v692 = vsel %vm246, %v672, %v683
        %v693 = vsel %vm246, %v673, %v685
        %694 = vrot.lane.b32.xlu0 %v670, 127
        %v695 = vpop.permute.xlu0 %694
        %696 = vrot.lane.b32.xlu0 %v671, 127
        %v697 = vpop.permute.xlu0 %696
        %698 = vrot.lane.b32.xlu0 %v672, 127
        %v699 = vpop.permute.xlu0 %698
        %700 = vrot.lane.b32.xlu0 %v673, 127
        %v701 = vpop.permute.xlu0 %700
        %v706 = vsel %vm263, %v695, %v670
        %v707 = vsel %vm263, %v697, %v671
        %v708 = vsel %vm263, %v699, %v672
        %v709 = vsel %vm263, %v701, %v673
        %v710 = vadd.f32 %v690, %v706
        %v711 = vadd.f32 %v691, %v707
        %v712 = vadd.f32 %v692, %v708
        %v713 = vadd.f32 %v693, %v709
        %v714 = vadd.f32 %v670, %v670
        %v715 = vadd.f32 %v671, %v671
        %v716 = vadd.f32 %v672, %v672
        %v717 = vadd.f32 %v673, %v673
        %719 = vset.pattern.permute.xlu0 1
        %720 = vperm.xlu0 %719, %v714
        %v721 = vpop.permute.xlu0 %720
        %724 = vset.pattern.permute.xlu0 1
        %725 = vperm.xlu0 %724, %v715
        %v726 = vpop.permute.xlu0 %725
        %729 = vset.pattern.permute.xlu0 1
        %730 = vperm.xlu0 %729, %v716
        %v731 = vpop.permute.xlu0 %730
        %734 = vset.pattern.permute.xlu0 1
        %735 = vperm.xlu0 %734, %v717
        %v736 = vpop.permute.xlu0 %735
        %v738 = vsel %vm224, %v721, %v710
        %v739 = vsel %vm224, %v726, %v711
        %v740 = vsel %vm224, %v731, %v712
        %v741 = vsel %vm224, %v736, %v713
        %742 = vset.pattern.permute.xlu0 14
        %743 = vperm.xlu0 %742, %v714
        %v744 = vpop.permute.xlu0 %743
        %746 = vset.pattern.permute.xlu0 14
        %747 = vperm.xlu0 %746, %v715
        %v748 = vpop.permute.xlu0 %747
        %750 = vset.pattern.permute.xlu0 14
        %751 = vperm.xlu0 %750, %v716
        %v752 = vpop.permute.xlu0 %751
        %754 = vset.pattern.permute.xlu0 14
        %755 = vperm.xlu0 %754, %v717
        %v756 = vpop.permute.xlu0 %755
        %v758 = vsel %vm225, %v744, %v738
        %v759 = vsel %vm225, %v748, %v739
        %v760 = vsel %vm225, %v752, %v740
        %v761 = vsel %vm225, %v756, %v741
        %v762 = vadd.f32 %v758, %v670
        %v763 = vadd.f32 %v759, %v671
        %v764 = vadd.f32 %v760, %v672
        %v765 = vadd.f32 %v761, %v673
        %v770 = vrot.slane %v762, 7
        %v771 = vrot.slane %v763, 7
        %v772 = vsel %vm328, %v770, %v771
        %v773 = vrot.slane %v764, 7
        %v774 = vrot.slane %v765, 7
        %v775 = vsel %vm328, %v773, %v774
        %v780 = vsel %vm328, %v762, %v770
        %v781 = vsel %vm328, %v764, %v773
        %v782 = vrot.slane %v762, 1
        %v783 = vrot.slane %v763, 1
        %v784 = vsel %vm341, %v782, %v783
        %v785 = vrot.slane %v764, 1
        %v786 = vrot.slane %v765, 1
        %v787 = vsel %vm341, %v785, %v786
        %v792 = vsel %vm341, %v783, %v763
        %v793 = vsel %vm341, %v786, %v765
        %v794 = vadd.f32 %v780, %v784
        %v795 = vadd.f32 %v772, %v792
        %v796 = vadd.f32 %v781, %v787
        %v797 = vadd.f32 %v775, %v793
        %v798 = vadd.f32 %v762, %v762
        %v799 = vadd.f32 %v764, %v764
        %v800 = vadd.f32 %v763, %v763
        %v801 = vadd.f32 %v765, %v765
        %v802 = vperm.slane %v798, 1
        %v803 = vperm.slane %v799, 1
        %v804 = vsel %vm226, %v802, %v794
        %v805 = vsel %vm227, %v802, %v795
        %v806 = vsel %vm226, %v803, %v796
        %v807 = vsel %vm227, %v803, %v797
        %v808 = vperm.slane %v800, 6
        %v809 = vperm.slane %v801, 6
        %v810 = vsel %vm228, %v808, %v804
        %v811 = vsel %vm229, %v808, %v805
        %v812 = vsel %vm228, %v809, %v806
        %v813 = vsel %vm229, %v809, %v807
        %v814 = vadd.f32 %v810, %v762
        %v815 = vadd.f32 %v811, %v763
        %v816 = vadd.f32 %v812, %v764
        %v817 = vadd.f32 %v813, %v765
        %v818 = vmul.f32 %v211, %v215
        %v819 = vmul.f32 %v212, %v216
        %v820 = vmul.f32 %v213, %v217
        %v821 = vmul.f32 %v214, %v218
        %826 = vrot.lane.b32.xlu0 %v818, 1
        %v827 = vpop.permute.xlu0 %826
        %828 = vrot.lane.b32.xlu0 %v819, 1
        %v829 = vpop.permute.xlu0 %828
        %830 = vrot.lane.b32.xlu0 %v820, 1
        %v831 = vpop.permute.xlu0 %830
        %832 = vrot.lane.b32.xlu0 %v821, 1
        %v833 = vpop.permute.xlu0 %832
        %v838 = vsel %vm246, %v818, %v827
        %v839 = vsel %vm246, %v819, %v829
        %v840 = vsel %vm246, %v820, %v831
        %v841 = vsel %vm246, %v821, %v833
        %842 = vrot.lane.b32.xlu0 %v818, 127
        %v843 = vpop.permute.xlu0 %842
        %844 = vrot.lane.b32.xlu0 %v819, 127
        %v845 = vpop.permute.xlu0 %844
        %846 = vrot.lane.b32.xlu0 %v820, 127
        %v847 = vpop.permute.xlu0 %846
        %848 = vrot.lane.b32.xlu0 %v821, 127
        %v849 = vpop.permute.xlu0 %848
        %v854 = vsel %vm263, %v843, %v818
        %v855 = vsel %vm263, %v845, %v819
        %v856 = vsel %vm263, %v847, %v820
        %v857 = vsel %vm263, %v849, %v821
        %v858 = vadd.f32 %v838, %v854
        %v859 = vadd.f32 %v839, %v855
        %v860 = vadd.f32 %v840, %v856
        %v861 = vadd.f32 %v841, %v857
        %v862 = vadd.f32 %v818, %v818
        %v863 = vadd.f32 %v819, %v819
        %v864 = vadd.f32 %v820, %v820
        %v865 = vadd.f32 %v821, %v821
        %867 = vset.pattern.permute.xlu0 1
        %868 = vperm.xlu0 %867, %v862
        %v869 = vpop.permute.xlu0 %868
        %872 = vset.pattern.permute.xlu0 1
        %873 = vperm.xlu0 %872, %v863
        %v874 = vpop.permute.xlu0 %873
        %877 = vset.pattern.permute.xlu0 1
        %878 = vperm.xlu0 %877, %v864
        %v879 = vpop.permute.xlu0 %878
        %882 = vset.pattern.permute.xlu0 1
        %883 = vperm.xlu0 %882, %v865
        %v884 = vpop.permute.xlu0 %883
        %v886 = vsel %vm224, %v869, %v858
        %v887 = vsel %vm224, %v874, %v859
        %v888 = vsel %vm224, %v879, %v860
        %v889 = vsel %vm224, %v884, %v861
        %890 = vset.pattern.permute.xlu0 14
        %891 = vperm.xlu0 %890, %v862
        %v892 = vpop.permute.xlu0 %891
        %894 = vset.pattern.permute.xlu0 14
        %895 = vperm.xlu0 %894, %v863
        %v896 = vpop.permute.xlu0 %895
        %898 = vset.pattern.permute.xlu0 14
        %899 = vperm.xlu0 %898, %v864
        %v900 = vpop.permute.xlu0 %899
        %902 = vset.pattern.permute.xlu0 14
        %903 = vperm.xlu0 %902, %v865
        %v904 = vpop.permute.xlu0 %903
        %v906 = vsel %vm225, %v892, %v886
        %v907 = vsel %vm225, %v896, %v887
        %v908 = vsel %vm225, %v900, %v888
        %v909 = vsel %vm225, %v904, %v889
        %v910 = vadd.f32 %v906, %v818
        %v911 = vadd.f32 %v907, %v819
        %v912 = vadd.f32 %v908, %v820
        %v913 = vadd.f32 %v909, %v821
        %v918 = vrot.slane %v910, 7
        %v919 = vrot.slane %v911, 7
        %v920 = vsel %vm328, %v918, %v919
        %v921 = vrot.slane %v912, 7
        %v922 = vrot.slane %v913, 7
        %v923 = vsel %vm328, %v921, %v922
        %v928 = vsel %vm328, %v910, %v918
        %v929 = vsel %vm328, %v912, %v921
        %v930 = vrot.slane %v910, 1
        %v931 = vrot.slane %v911, 1
        %v932 = vsel %vm341, %v930, %v931
        %v933 = vrot.slane %v912, 1
        %v934 = vrot.slane %v913, 1
        %v935 = vsel %vm341, %v933, %v934
        %v940 = vsel %vm341, %v931, %v911
        %v941 = vsel %vm341, %v934, %v913
        %v942 = vadd.f32 %v928, %v932
        %v943 = vadd.f32 %v920, %v940
        %v944 = vadd.f32 %v929, %v935
        %v945 = vadd.f32 %v923, %v941
        %v946 = vadd.f32 %v910, %v910
        %v947 = vadd.f32 %v912, %v912
        %v948 = vadd.f32 %v911, %v911
        %v949 = vadd.f32 %v913, %v913
        %v950 = vperm.slane %v946, 1
        %v951 = vperm.slane %v947, 1
        %v952 = vsel %vm226, %v950, %v942
        %v953 = vsel %vm227, %v950, %v943
        %v954 = vsel %vm226, %v951, %v944
        %v955 = vsel %vm227, %v951, %v945
        %v956 = vperm.slane %v948, 6
        %v957 = vperm.slane %v949, 6
        %v958 = vsel %vm228, %v956, %v952
        %v959 = vsel %vm229, %v956, %v953
        %v960 = vsel %vm228, %v957, %v954
        %v961 = vsel %vm229, %v957, %v955
        %v962 = vadd.f32 %v958, %v910
        %v963 = vadd.f32 %v959, %v911
        %v964 = vadd.f32 %v960, %v912
        %v965 = vadd.f32 %v961, %v913
        %v966 = vmul.f32 %v374, %v518
        %v967 = vmul.f32 %v375, %v519
        %v968 = vmul.f32 %v376, %v520
        %v969 = vmul.f32 %v377, %v521
        %v970 = vmul.f32 %v374, %v374
        %v971 = vmul.f32 %v375, %v375
        %v972 = vmul.f32 %v376, %v376
        %v973 = vmul.f32 %v377, %v377
        %v974 = vmul.f32 %v518, %v518
        %v975 = vmul.f32 %v519, %v519
        %v976 = vmul.f32 %v520, %v520
        %v977 = vmul.f32 %v521, %v521
        %v978 = vadd.f32 %v970, %v974
        %v979 = vadd.f32 %v971, %v975
        %v980 = vadd.f32 %v972, %v976
        %v981 = vadd.f32 %v973, %v977
        %v982 = vmul.f32 %v966, 0.11111111
        %v983 = vmul.f32 %v967, 0.11111111
        %v984 = vmul.f32 %v968, 0.11111111
        %v985 = vmul.f32 %v969, 0.11111111
        %v986 = vmul.f32 %v978, 0.11111111
        %v987 = vmul.f32 %v979, 0.11111111
        %v988 = vmul.f32 %v980, 0.11111111
        %v989 = vmul.f32 %v981, 0.11111111
        %v990 = vadd.f32 %v966, %v966
        %v991 = vadd.f32 %v967, %v967
        %v992 = vadd.f32 %v968, %v968
        %v993 = vadd.f32 %v969, %v969
        %v994 = vadd.f32 %v990, 0.0081
        %v995 = vadd.f32 %v991, 0.0081
        %v996 = vadd.f32 %v992, 0.0081
        %v997 = vadd.f32 %v993, 0.0081
        %v998 = vsub.f32 %v962, %v982
        %v999 = vsub.f32 %v963, %v983
        %v1000 = vsub.f32 %v964, %v984
        %v1001 = vsub.f32 %v965, %v985
        %v1002 = vmul.f32 %v998, 2.0
        %v1003 = vmul.f32 %v999, 2.0
        %v1004 = vmul.f32 %v1000, 2.0
        %v1005 = vmul.f32 %v1001, 2.0
        %v1006 = vadd.f32 %v1002, 0.0081
        %v1007 = vadd.f32 %v1003, 0.0081
        %v1008 = vadd.f32 %v1004, 0.0081
        %v1009 = vadd.f32 %v1005, 0.0081
        %v1010 = vmul.f32 %v994, %v1006
        %v1011 = vmul.f32 %v995, %v1007
        %v1012 = vmul.f32 %v996, %v1008
        %v1013 = vmul.f32 %v997, %v1009
        %v1014 = vadd.f32 %v978, 0.0081
        %v1015 = vadd.f32 %v979, 0.0081
        %v1016 = vadd.f32 %v980, 0.0081
        %v1017 = vadd.f32 %v981, 0.0081
        %v1018 = vadd.f32 %v666, %v814
        %v1019 = vadd.f32 %v667, %v815
        %v1020 = vadd.f32 %v668, %v816
        %v1021 = vadd.f32 %v669, %v817
        %v1022 = vsub.f32 %v1018, %v986
        %v1023 = vsub.f32 %v1019, %v987
        %v1024 = vsub.f32 %v1020, %v988
        %v1025 = vsub.f32 %v1021, %v989
        %v1026 = vadd.f32 %v1022, 0.0081
        %v1027 = vadd.f32 %v1023, 0.0081
        %v1028 = vadd.f32 %v1024, 0.0081
        %v1029 = vadd.f32 %v1025, 0.0081
        %v1030 = vmul.f32 %v1014, %v1026
        %v1031 = vmul.f32 %v1015, %v1027
        %v1032 = vmul.f32 %v1016, %v1028
        %v1033 = vmul.f32 %v1017, %v1029
        %v1034 = vrcp.pop %v1030
        %v1035 = vmul.f32 %v1030, %v1034
        %v1036 = vsub.f32 1.0, %v1035
        %v1037 = vmul.f32 %v1034, %v1036
        %v1038 = vadd.f32 %v1034, %v1037
        %vm1039 = vweird.f32 %v1030
        %vm1040 = vweird.f32 %v1034
        %vm1041 = vmor %vm1039, %vm1040
        %v1042 = vsel %vm1041, %v1034, %v1038
        %v1043 = vand.u32 2147483647, %v1030
        %vm1044 = vcmp.eq.f32.partialorder %v1043, 8.507059e+37
        %v1045 = vand.u32 %v1030, 2147483648
        %v1046 = vor.u32 1.1754944e-38, %v1045
        %v1047 = vsel %vm1044, %v1046, %v1042
        %v1048 = vmul.f32 %v1010, %v1047
        %v1049 = vrcp.pop %v1031
        %v1050 = vmul.f32 %v1031, %v1049
        %v1051 = vsub.f32 1.0, %v1050
        %v1052 = vmul.f32 %v1049, %v1051
        %v1053 = vadd.f32 %v1049, %v1052
        %vm1054 = vweird.f32 %v1031
        %vm1055 = vweird.f32 %v1049
        %vm1056 = vmor %vm1054, %vm1055
        %v1057 = vsel %vm1056, %v1049, %v1053
        %v1058 = vand.u32 2147483647, %v1031
        %vm1059 = vcmp.eq.f32.partialorder %v1058, 8.507059e+37
        %v1060 = vand.u32 %v1031, 2147483648
        %v1061 = vor.u32 1.1754944e-38, %v1060
        %v1062 = vsel %vm1059, %v1061, %v1057
        %v1063 = vmul.f32 %v1011, %v1062
        %v1064 = vrcp.pop %v1032
        %v1065 = vmul.f32 %v1032, %v1064
        %v1066 = vsub.f32 1.0, %v1065
        %v1067 = vmul.f32 %v1064, %v1066
        %v1068 = vadd.f32 %v1064, %v1067
        %vm1069 = vweird.f32 %v1032
        %vm1070 = vweird.f32 %v1064
        %vm1071 = vmor %vm1069, %vm1070
        %v1072 = vsel %vm1071, %v1064, %v1068
        %v1073 = vand.u32 2147483647, %v1032
        %vm1074 = vcmp.eq.f32.partialorder %v1073, 8.507059e+37
        %v1075 = vand.u32 %v1032, 2147483648
        %v1076 = vor.u32 1.1754944e-38, %v1075
        %v1077 = vsel %vm1074, %v1076, %v1072
        %v1078 = vmul.f32 %v1012, %v1077
        %v1079 = vrcp.pop %v1033
        %v1080 = vmul.f32 %v1033, %v1079
        %v1081 = vsub.f32 1.0, %v1080
        %v1082 = vmul.f32 %v1079, %v1081
        %v1083 = vadd.f32 %v1079, %v1082
        %vm1084 = vweird.f32 %v1033
        %vm1085 = vweird.f32 %v1079
        %vm1086 = vmor %vm1084, %vm1085
        %v1087 = vsel %vm1086, %v1079, %v1083
        %v1088 = vand.u32 2147483647, %v1033
        %vm1089 = vcmp.eq.f32.partialorder %v1088, 8.507059e+37
        %v1090 = vand.u32 %v1033, 2147483648
        %v1091 = vor.u32 1.1754944e-38, %v1090
        %v1092 = vsel %vm1089, %v1091, %v1087
        %v1093 = vmul.f32 %v1013, %v1092
        %v1094 = vsub.f32 1.0, %v1048
        %v1095 = vsub.f32 1.0, %v1063
        %v1096 = vsub.f32 1.0, %v1078
        %v1097 = vsub.f32 1.0, %v1093
        %v1098 = vmul.f32 %v1094, 0.5
        %v1099 = vmul.f32 %v1095, 0.5
        %v1100 = vmul.f32 %v1096, 0.5
        %v1101 = vmul.f32 %v1097, 0.5
        %v1102 = vmax.f32 %v1098, 0.0
        %v1103 = vmax.f32 %v1099, 0.0
        %v1104 = vmax.f32 %v1100, 0.0
        %v1105 = vmax.f32 %v1101, 0.0
        %v1106 = vmin.f32 %v1102, 1.0
        %v1107 = vmin.f32 %v1103, 1.0
        %v1108 = vmin.f32 %v1104, 1.0
        %v1109 = vmin.f32 %v1105, 1.0
        %vm1110 = vcmask 130048
        %1111 = vst.msk [vmem:[%s207] sm:$0xff] %vm1110, %v1106
        %1112 = vst.msk [vmem:[%s207 + $0x8] sm:$0xff] %vm1110, %v1107
        %1113 = vst.msk [vmem:[%s207 + $0x10] sm:$0xff] %vm1110, %v1108
        %1114 = vst.msk [vmem:[%s207 + $0x18] sm:$0xff] %vm1110, %v1109
        %s1115 = sand.u32 %s82, 1
        %s1116 = scalar_lea.sflag [#allocation4], %s1115
        %s1117 = sand.u32 %s82, 1
        %s1118 = smul.addr %s1117, 32
        %s1119 = scalar_lea.vmem [#allocation7], %s1118
        // Predicated region
        $region37: #{tpu_custom_call.1} parent=27 // pred_check
          %p1120 = pneg %p92
        $region38: #{tpu_custom_call.1} parent=27 // pred_check_branch
          %1122 = sbr.rel (%p1120) target = $region40
        $region39: #{tpu_custom_call.1} parent=27 // pred_region
          %s1123 = smul.u32 2, %s22
          %1125 = vsyncadd %s1116, 0
          %s1126 = smul.addr %s1123, 2
          %s1127 = smul.addr %s1126, 8
          %s1128 = scalar_lea.hbm %s2, %s1127
          %s1129 = sshll.u32 %s1119, 4
          %s1130 = int_to_ptr.vmem [resolvable:$true] %s1129
          %s1131 = sshll.u32 %s1128, 4
          %s1132 = int_to_ptr.hbm [resolvable:$true] %s1131
          %1137 = dma.vmem_to_hbm [thread:$0]  %s1130, 512, %s1132, %s1116, 128, 128, 8
        $region40: #{tpu_custom_call.1} parent=27 // pred_fallthru
          _
      $region28: #{tpu_custom_call.1} parent=5 // pred_fallthru
        _
      %p1138 = scmp.le.s32.totalorder 2, %s17
      // Predicated region
      $region41: #{tpu_custom_call.1} parent=5 // pred_check
        %p1139 = pneg %p1138
      $region42: #{tpu_custom_call.1} parent=5 // pred_check_branch
        %1141 = sbr.rel (%p1139) target = $region44
      $region43: #{tpu_custom_call.1} parent=5 // pred_region
        %s1142 = ssub.s32 %s17, 2
        // Predicated region
        $region45: #{tpu_custom_call.1} parent=43 // pred_check
          %p1143 = pneg %p98
        $region46: #{tpu_custom_call.1} parent=43 // pred_check_branch
          %1145 = sbr.rel (%p1143) target = $region48
        $region47: #{tpu_custom_call.1} parent=43 // pred_region
          %s1146 = sand.u32 %s83, 1
          %s1147 = scalar_lea.sflag [#allocation4], %s1146
          %s1148 = sand.u32 %s83, 1
          %s1149 = smul.addr %s1148, 32
          %s1150 = scalar_lea.vmem [#allocation7], %s1149
          %1152 = dma.done %s1147, 512
        $region48: #{tpu_custom_call.1} parent=43 // pred_fallthru
          _
      $region44: #{tpu_custom_call.1} parent=5 // pred_fallthru
        _
    $region6: #{tpu_custom_call.1} parent=1 // loop_footer
      %s21 = sadd.s32 1, %s17
    $region7: #{tpu_custom_call.1} parent=1 // loop_footer_branch
      %16 = sbr.rel target = $region3
    $region8: #{tpu_custom_call.1} parent=1 // loop_exit
      _
    %1153 = vsyncpa [#allocation3], 1
    %s1154 = scalar_lea.sflag [#allocation3], 1
    %1155 = vsyncpa %s1154, 1
    %1156 = vsyncpa [#allocation6], 1
    %s1157 = scalar_lea.sflag [#allocation6], 1
    %1158 = vsyncpa %s1157, 1
    %1159 = vsyncpa [#allocation4], 1
    %s1160 = scalar_lea.sflag [#allocation4], 1
    %1161 = vsyncpa %s1160, 1

</llo_original>
